<compile_context>
chip_gen: v6e
topology: v6e:2x2x1
jax: 0.10.0
libtpu: 0.0.40
codegen_flags: <defaults>
</compile_context>

<pallas_src>
import functools
import math

import jax
import jax.numpy as jnp
from jax import lax
from jax.experimental import pallas as pl
from jax.experimental.pallas import tpu as pltpu

BN_EPS = 1e-5
MXU_DTYPE = jnp.bfloat16     # MXU operand dtype (f32 accumulation on the MXU)
Z_DTYPE = jnp.bfloat16       # dtype of the z1/z2 intermediates in HBM
_LANES = 128


# ---------------------------------------------------------------------------
# Kernels
# ---------------------------------------------------------------------------
def _conv_stage_kernel(x_ref, w_ref, a_ref, b_ref, z_ref, psum_ref, psq_ref,
                       *, fuse_input_bn_relu):
    """One image per grid step, lane-dense (H, W*C) activation layout.

    x_ref:   (1, H, W*Cin)            input activations (channels fastest on lanes)
    w_ref:   (3*W*Cin, W*Cout) bf16   banded im2col weights (dw taps + W-padding folded in)
    a_ref/b_ref: (1, W*Cin) f32       fused BN scale/shift of the previous layer
                                      (read only when fuse_input_bn_relu=True)
    z_ref:   (1, H, W*Cout)           pre-BN conv output (bf16)
    psum_ref/psq_ref: (1, 1, W*Cout)  per-image partial sums over H (f32)
    """
    x = x_ref[0].astype(jnp.float32)                           # (H, W*Cin), f32 math
    h = x.shape[0]

    if fuse_input_bn_relu:
        # Previous conv's BatchNorm + ReLU, fused into this conv's input read.
        x = jnp.maximum(x * a_ref[...] + b_ref[...], 0.0)

    # dh = -1 / +1 taps: one XLU sublane roll each + one row-mask select each.
    # (dw taps and SAME padding along W are folded into the banded weights.)
    rows = lax.broadcasted_iota(jnp.int32, (h, 1), 0)
    x_up = jnp.where(rows >= 1, pltpu.roll(x, shift=1, axis=0), 0.0)      # x[h-1]
    x_dn = jnp.where(rows < h - 1, pltpu.roll(x, shift=h - 1, axis=0), 0.0)  # x[h+1]

    # Single MXU contraction: (H, 3*W*Cin) @ (3*W*Cin, W*Cout) -> (H, W*Cout), f32 acc.
    taps = jnp.concatenate(
        [x_up.astype(MXU_DTYPE), x.astype(MXU_DTYPE), x_dn.astype(MXU_DTYPE)], axis=-1)
    acc = jnp.dot(taps, w_ref[...], preferred_element_type=jnp.float32)

    # Single-pass BN statistics (sum over H only; W-fold + N-fold done in the wrapper)
    # taken from the f32 accumulator before the bf16 downcast.
    psum_ref[0] = jnp.sum(acc, axis=0, keepdims=True)
    psq_ref[0] = jnp.sum(acc * acc, axis=0, keepdims=True)
    z_ref[0] = acc.astype(z_ref.dtype)


def _bn_relu_kernel(z_ref, a_ref, b_ref, o_ref):
    """Final fused BatchNorm (precomputed per-channel scale/shift) + ReLU."""
    y = z_ref[0].astype(jnp.float32) * a_ref[...] + b_ref[...]
    o_ref[0] = jnp.maximum(y, 0.0).astype(o_ref.dtype)


# ---------------------------------------------------------------------------
# pallas_call wrappers
# ---------------------------------------------------------------------------
def _vmem_limit_bytes():
    # 3/4 of physical VMEM, capped at 64 MiB: raises the default scoped limit on
    # v5e/v6e (16/32 MiB of 128 MiB) while keeping headroom on v7x (64 MiB/TC).
    try:
        cap = int(pltpu.get_tpu_info().vmem_capacity_bytes)
    except Exception:
        cap = 128 * 1024 * 1024
    return min(64 * 1024 * 1024, (cap * 3) // 4)


def _compiler_params():
    return pltpu.CompilerParams(dimension_semantics=("parallel",),
                                vmem_limit_bytes=_vmem_limit_bytes())


def _pad_channels(c, width):
    """Smallest C' >= c such that width*C' is a multiple of the 128-lane vreg width."""
    unit = _LANES // math.gcd(_LANES, width)
    return ((c + unit - 1) // unit) * unit


def _banded_weights(w_hwio, width):
    """(3, 3, Cin, Cout) HWIO -> (3*W*Cin, W*Cout) bf16 banded im2col weight matrix.

    Row block kh multiplies the input rows shifted by dh = kh - 1.  Within a block,
    entry [w_src*Cin + ci, w*Cout + co] equals w_hwio[kh, w_src - w + 1, ci, co] when
    |w_src - w| <= 1 and 0 otherwise, which folds the three dw taps *and* the SAME
    zero padding along W into a single MXU contraction.
    """
    kh_n, kw_n, cin, cout = w_hwio.shape
    w_src = jnp.arange(width)[:, None]
    w_dst = jnp.arange(width)[None, :]
    kw_idx = w_src - w_dst + 1                               # (W, W)
    in_band = (kw_idx >= 0) & (kw_idx < kw_n)
    kw_safe = jnp.clip(kw_idx, 0, kw_n - 1)
    blocks = []
    for kh in range(kh_n):
        blk = w_hwio[kh][kw_safe]                            # (W, W, Cin, Cout)
        blk = jnp.where(in_band[:, :, None, None], blk, 0.0)
        blk = jnp.transpose(blk, (0, 2, 1, 3)).reshape(width * cin, width * cout)
        blocks.append(blk)
    return jnp.concatenate(blocks, axis=0).astype(MXU_DTYPE)


def _conv_stage(x, w_bd, a_in, b_in, *, fuse_input_bn_relu):
    """Banded-im2col 3x3 conv (+ optional fused input BN/ReLU) on (N, H, W*Cin)."""
    n, h, wcin = x.shape
    k, wcout = w_bd.shape
    kernel = functools.partial(_conv_stage_kernel,
                               fuse_input_bn_relu=fuse_input_bn_relu)
    return pl.pallas_call(
        kernel,
        grid=(n,),
        in_specs=[
            pl.BlockSpec((1, h, wcin), lambda i: (i, 0, 0)),
            pl.BlockSpec((k, wcout), lambda i: (0, 0)),
            pl.BlockSpec((1, wcin), lambda i: (0, 0)),
            pl.BlockSpec((1, wcin), lambda i: (0, 0)),
        ],
        out_specs=(
            pl.BlockSpec((1, h, wcout), lambda i: (i, 0, 0)),
            pl.BlockSpec((1, 1, wcout), lambda i: (i, 0, 0)),
            pl.BlockSpec((1, 1, wcout), lambda i: (i, 0, 0)),
        ),
        out_shape=(
            jax.ShapeDtypeStruct((n, h, wcout), Z_DTYPE),       # pre-BN conv output
            jax.ShapeDtypeStruct((n, 1, wcout), jnp.float32),   # per-image sum over H
            jax.ShapeDtypeStruct((n, 1, wcout), jnp.float32),   # per-image sum of squares
        ),
        compiler_params=_compiler_params(),
    )(x, w_bd, a_in, b_in)


def _bn_relu_apply(z, a, b, out_dtype):
    n, h, wc = z.shape
    return pl.pallas_call(
        _bn_relu_kernel,
        grid=(n,),
        in_specs=[
            pl.BlockSpec((1, h, wc), lambda i: (i, 0, 0)),
            pl.BlockSpec((1, wc), lambda i: (0, 0)),
            pl.BlockSpec((1, wc), lambda i: (0, 0)),
        ],
        out_specs=pl.BlockSpec((1, h, wc), lambda i: (i, 0, 0)),
        out_shape=jax.ShapeDtypeStruct((n, h, wc), out_dtype),
        compiler_params=_compiler_params(),
    )(z, a, b)


def _bn_coeffs(psum, psq, gamma, beta, count, width, cout):
    """Fused per-channel BN scale/shift (training-mode batch stats, biased variance),
    returned pre-tiled to the lane-dense (1, W*Cout) layout."""
    s = jnp.sum(psum.reshape(-1, width, cout), axis=(0, 1))     # (Cout,)
    q = jnp.sum(psq.reshape(-1, width, cout), axis=(0, 1))
    mean = s / count
    var = q / count - mean * mean
    a = gamma * lax.rsqrt(var + BN_EPS)
    b = beta - mean * a
    return jnp.tile(a, width)[None, :], jnp.tile(b, width)[None, :]   # (1, W*Cout)


def double_conv(x_nchw, params):
    """Pallas DoubleConv forward. x_nchw: (N, Cin, H, W) -> (N, Cout, H, W)."""
    n, cin, h, w = x_nchw.shape
    cout = params["w1"].shape[-1]
    n_px = n * h * w
    cin_p = _pad_channels(cin, w)

    # NCHW -> lane-dense (N, H, W*Cin_pad), channels fastest on lanes.  The boundary
    # transposes exist only to honour the PyTorch NCHW interface; in a fully NHWC
    # model they (and the Cin zero-pad) disappear.
    x = jnp.transpose(x_nchw, (0, 2, 3, 1))
    if cin_p != cin:
        x = jnp.pad(x, ((0, 0), (0, 0), (0, 0), (0, cin_p - cin)))
    x = x.reshape(n, h, w * cin_p)

    # Banded im2col weights, built and cast to bf16 once (outside the kernels).
    w1 = params["w1"]
    if cin_p != cin:
        w1 = jnp.pad(w1, ((0, 0), (0, 0), (0, cin_p - cin), (0, 0)))
    w1_bd = _banded_weights(w1, w)
    w2_bd = _banded_weights(params["w2"], w)

    ident_a = jnp.ones((1, w * cin_p), jnp.float32)
    ident_b = jnp.zeros((1, w * cin_p), jnp.float32)

    # Conv biases are intentionally unused by the kernels: BN's batch-mean subtraction
    # cancels any per-channel constant (the f32 reference keeps them and still matches).
    z1, s1, q1 = _conv_stage(x, w1_bd, ident_a, ident_b, fuse_input_bn_relu=False)
    a1, b1 = _bn_coeffs(s1, q1, params["g1"], params["beta1"], n_px, w, cout)

    z2, s2, q2 = _conv_stage(z1, w2_bd, a1, b1, fuse_input_bn_relu=True)
    a2, b2 = _bn_coeffs(s2, q2, params["g2"], params["beta2"], n_px, w, cout)

    out = _bn_relu_apply(z2, a2, b2, x_nchw.dtype)               # (N, H, W*Cout)
    return jnp.transpose(out.reshape(n, h, w, cout), (0, 3, 1, 2))


# ---------------------------------------------------------------------------
# Pure-JAX reference (PyTorch forward semantics) and synthetic parameters
# ---------------------------------------------------------------------------
def double_conv_ref(x_nchw, params):
    """Pure-JAX f32 reference with full DoubleConv forward semantics (incl. biases)."""
    def conv(x, w_hwio, b):
        y = lax.conv_general_dilated(
            x, w_hwio, window_strides=(1, 1), padding="SAME",
            dimension_numbers=("NHWC", "HWIO", "NHWC"))
        return y + b.reshape(1, 1, 1, -1)

    def bn_relu(y, g, be):
        mean = jnp.mean(y, axis=(0, 1, 2), keepdims=True)
        var = jnp.mean((y - mean) ** 2, axis=(0, 1, 2), keepdims=True)
        yn = (y - mean) * lax.rsqrt(var + BN_EPS)
        yn = yn * g.reshape(1, 1, 1, -1) + be.reshape(1, 1, 1, -1)
        return jnp.maximum(yn, 0.0)

    x = jnp.transpose(x_nchw, (0, 2, 3, 1))
    y = bn_relu(conv(x, params["w1"], params["b1"]), params["g1"], params["beta1"])
    y = bn_relu(conv(y, params["w2"], params["b2"]), params["g2"], params["beta2"])
    return jnp.transpose(y, (0, 3, 1, 2))


def init_params(key, in_c, out_c):
    """Deterministic synthetic parameters (shapes match nn.Conv2d / nn.BatchNorm2d)."""
    k1, k2, k3, k4 = jax.random.split(key, 4)
    # Conv weights stored HWIO (PyTorch stores OIHW; same math after transpose).
    w1 = jax.random.normal(k1, (3, 3, in_c, out_c), jnp.float32) * 0.2
    b1 = jax.random.normal(k2, (out_c,), jnp.float32) * 0.1
    w2 = jax.random.normal(k3, (3, 3, out_c, out_c), jnp.float32) * 0.2
    b2 = jax.random.normal(k4, (out_c,), jnp.float32) * 0.1
    # BatchNorm affine params (PyTorch default init: gamma=1, beta=0).
    g1 = jnp.ones((out_c,), jnp.float32)
    beta1 = jnp.zeros((out_c,), jnp.float32)
    g2 = jnp.ones((out_c,), jnp.float32)
    beta2 = jnp.zeros((out_c,), jnp.float32)
    return dict(w1=w1, b1=b1, g1=g1, beta1=beta1,
                w2=w2, b2=b2, g2=g2, beta2=beta2)


if __name__ == "__main__":
    key = jax.random.PRNGKey(0)
    k_x, k_p = jax.random.split(key)

    N, Cin, Cout, H, W = 2, 4, 8, 16, 16
    x = jax.random.normal(k_x, (N, Cin, H, W), jnp.float32)
    params = init_params(k_p, Cin, Cout)

    out = jax.block_until_ready(jax.jit(double_conv)(x, params))
    ref = jax.block_until_ready(double_conv_ref(x, params))

    assert out.shape == (N, Cout, H, W)
    # bf16 MXU operands + bf16 z1/z2 intermediates vs a pure-f32 reference across the
    # two chained convs; BN renormalization keeps the error relative (~1e-2).
    max_err = float(jnp.max(jnp.abs(out - ref)))
    assert jnp.allclose(out, ref, atol=5e-2, rtol=5e-2), max_err

    print("KERNEL_OK")
</pallas_src>

<mosaic_0001>
module attributes {stable_mosaic.version = 11 : i64} {
  func.func @_conv_stage_kernel(%arg0: i32, %arg1: memref<1x16x128xf32, #tpu.memory_space<vmem>>, %arg2: memref<384x128xbf16, #tpu.memory_space<vmem>>, %arg3: memref<1x128xf32, #tpu.memory_space<vmem>>, %arg4: memref<1x128xf32, #tpu.memory_space<vmem>>, %arg5: memref<1x16x128xbf16, #tpu.memory_space<vmem>>, %arg6: memref<1x1x128xf32, #tpu.memory_space<vmem>>, %arg7: memref<1x1x128xf32, #tpu.memory_space<vmem>>) attributes {dimension_semantics = [#tpu.dimension_semantics<parallel>], iteration_bounds = array<i64: 2>, scalar_prefetch = 0 : i64, scratch_operands = 0 : i64, tpu.core_type = #tpu.core_type<tc>, window_params = [{transform_indices = @transform_0, window_bounds = array<i64: 1, 16, 128>}, {pipeline_mode = #tpu.pipeline_mode<synchronous>, transform_indices = @transform_1, window_bounds = array<i64: 384, 128>}, {pipeline_mode = #tpu.pipeline_mode<synchronous>, transform_indices = @transform_2, window_bounds = array<i64: 1, 128>}, {pipeline_mode = #tpu.pipeline_mode<synchronous>, transform_indices = @transform_3, window_bounds = array<i64: 1, 128>}, {transform_indices = @transform_4, window_bounds = array<i64: 1, 16, 128>}, {transform_indices = @transform_5, window_bounds = array<i64: 1, 1, 128>}, {transform_indices = @transform_6, window_bounds = array<i64: 1, 1, 128>}]} {
    %c0 = arith.constant 0 : index
    %c0_0 = arith.constant 0 : index
    %c0_1 = arith.constant 0 : index
    %0 = vector.load %arg1[%c0, %c0_0, %c0_1] : memref<1x16x128xf32, #tpu.memory_space<vmem>>, vector<1x16x128xf32>
    %1 = vector.shape_cast %0 : vector<1x16x128xf32> to vector<16x128xf32>
    %2 = tpu.iota {dimensions = array<i32: 0>} : vector<16x1xi32>
    %c1_i32 = arith.constant 1 : i32
    %3 = vector.broadcast %c1_i32 : i32 to vector<16x1xi32>
    %4 = arith.cmpi sge, %2, %3 : vector<16x1xi32>
    %c1_i32_2 = arith.constant 1 : i32
    %5 = tpu.dynamic_rotate %1 by %c1_i32_2 dim 0 : vector<16x128xf32>, i32 -> vector<16x128xf32>
    %cst = arith.constant 0.000000e+00 : f32
    %6 = vector.shape_cast %4 : vector<16x1xi1> to vector<16x1xi1>
    %7 = vector.broadcast %6 : vector<16x1xi1> to vector<16x128xi1>
    %8 = vector.broadcast %cst : f32 to vector<16x128xf32>
    %9 = arith.select %7, %5, %8 : vector<16x128xi1>, vector<16x128xf32>
    %c15_i32 = arith.constant 15 : i32
    %10 = vector.broadcast %c15_i32 : i32 to vector<16x1xi32>
    %11 = arith.cmpi slt, %2, %10 : vector<16x1xi32>
    %c15_i32_3 = arith.constant 15 : i32
    %12 = tpu.dynamic_rotate %1 by %c15_i32_3 dim 0 : vector<16x128xf32>, i32 -> vector<16x128xf32>
    %cst_4 = arith.constant 0.000000e+00 : f32
    %13 = vector.shape_cast %11 : vector<16x1xi1> to vector<16x1xi1>
    %14 = vector.broadcast %13 : vector<16x1xi1> to vector<16x128xi1>
    %15 = vector.broadcast %cst_4 : f32 to vector<16x128xf32>
    %16 = arith.select %14, %12, %15 : vector<16x128xi1>, vector<16x128xf32>
    %17 = arith.truncf %9 : vector<16x128xf32> to vector<16x128xbf16>
    %18 = arith.truncf %1 : vector<16x128xf32> to vector<16x128xbf16>
    %19 = arith.truncf %16 : vector<16x128xf32> to vector<16x128xbf16>
    %20 = tpu.concatenate %17, %18, %19 in 1 : vector<16x128xbf16>, vector<16x128xbf16>, vector<16x128xbf16> -> vector<16x384xbf16>
    %c0_5 = arith.constant 0 : index
    %c0_6 = arith.constant 0 : index
    %21 = vector.load %arg2[%c0_5, %c0_6] : memref<384x128xbf16, #tpu.memory_space<vmem>>, vector<384x128xbf16>
    %cst_7 = arith.constant dense<0.000000e+00> : vector<16x128xf32>
    %22 = tpu.matmul %20, %21, %cst_7 {dimension_numbers = #tpu.dot_dimension_numbers<[1], [0], [0], [1], [0, 0, 1, 1], [], []>} : vector<16x384xbf16>, vector<384x128xbf16>, vector<16x128xf32> -> vector<16x128xf32>
    %cst_8 = arith.constant dense<0.000000e+00> : vector<128xf32>
    %23 = vector.multi_reduction <add>, %22, %cst_8 [0] : vector<16x128xf32> to vector<128xf32>
    %24 = vector.shape_cast %23 : vector<128xf32> to vector<1x128xf32>
    %c0_9 = arith.constant 0 : index
    %c0_10 = arith.constant 0 : index
    %c0_11 = arith.constant 0 : index
    %25 = vector.load %arg6[%c0_9, %c0_10, %c0_11] : memref<1x1x128xf32, #tpu.memory_space<vmem>>, vector<1x1x128xf32>
    %26 = vector.shape_cast %25 : vector<1x1x128xf32> to vector<1x128xf32>
    %27 = vector.shape_cast %24 : vector<1x128xf32> to vector<1x1x128xf32>
    tpu.vector_store %arg6[%c0_9, %c0_10, %c0_11], %27 {strides = array<i32>} : memref<1x1x128xf32, #tpu.memory_space<vmem>>, vector<1x1x128xf32>,
    %28 = arith.mulf %22, %22 : vector<16x128xf32>
    %cst_12 = arith.constant dense<0.000000e+00> : vector<128xf32>
    %29 = vector.multi_reduction <add>, %28, %cst_12 [0] : vector<16x128xf32> to vector<128xf32>
    %30 = vector.shape_cast %29 : vector<128xf32> to vector<1x128xf32>
    %c0_13 = arith.constant 0 : index
    %c0_14 = arith.constant 0 : index
    %c0_15 = arith.constant 0 : index
    %31 = vector.load %arg7[%c0_13, %c0_14, %c0_15] : memref<1x1x128xf32, #tpu.memory_space<vmem>>, vector<1x1x128xf32>
    %32 = vector.shape_cast %31 : vector<1x1x128xf32> to vector<1x128xf32>
    %33 = vector.shape_cast %30 : vector<1x128xf32> to vector<1x1x128xf32>
    tpu.vector_store %arg7[%c0_13, %c0_14, %c0_15], %33 {strides = array<i32>} : memref<1x1x128xf32, #tpu.memory_space<vmem>>, vector<1x1x128xf32>,
    %34 = arith.truncf %22 : vector<16x128xf32> to vector<16x128xbf16>
    %c0_16 = arith.constant 0 : index
    %c0_17 = arith.constant 0 : index
    %c0_18 = arith.constant 0 : index
    %35 = vector.load %arg5[%c0_16, %c0_17, %c0_18] : memref<1x16x128xbf16, #tpu.memory_space<vmem>>, vector<1x16x128xbf16>
    %36 = vector.shape_cast %35 : vector<1x16x128xbf16> to vector<16x128xbf16>
    %37 = vector.shape_cast %34 : vector<16x128xbf16> to vector<1x16x128xbf16>
    tpu.vector_store %arg5[%c0_16, %c0_17, %c0_18], %37 {strides = array<i32>} : memref<1x16x128xbf16, #tpu.memory_space<vmem>>, vector<1x16x128xbf16>,
    return
  }
  func.func @transform_0(%arg0: i32) -> (i32, i32, i32) {
    %c0_i32 = arith.constant 0 : i32
    %c0_i32_0 = arith.constant 0 : i32
    %c0_i32_1 = arith.constant 0 : i32
    return %arg0, %c0_i32, %c0_i32_0 : i32, i32, i32
  }
  func.func @transform_1(%arg0: i32) -> (i32, i32) {
    %c0_i32 = arith.constant 0 : i32
    %c0_i32_0 = arith.constant 0 : i32
    %c0_i32_1 = arith.constant 0 : i32
    return %c0_i32, %c0_i32_0 : i32, i32
  }
  func.func @transform_2(%arg0: i32) -> (i32, i32) {
    %c0_i32 = arith.constant 0 : i32
    %c0_i32_0 = arith.constant 0 : i32
    %c0_i32_1 = arith.constant 0 : i32
    return %c0_i32, %c0_i32_0 : i32, i32
  }
  func.func @transform_3(%arg0: i32) -> (i32, i32) {
    %c0_i32 = arith.constant 0 : i32
    %c0_i32_0 = arith.constant 0 : i32
    %c0_i32_1 = arith.constant 0 : i32
    return %c0_i32, %c0_i32_0 : i32, i32
  }
  func.func @transform_4(%arg0: i32) -> (i32, i32, i32) {
    %c0_i32 = arith.constant 0 : i32
    %c0_i32_0 = arith.constant 0 : i32
    %c0_i32_1 = arith.constant 0 : i32
    return %arg0, %c0_i32, %c0_i32_0 : i32, i32, i32
  }
  func.func @transform_5(%arg0: i32) -> (i32, i32, i32) {
    %c0_i32 = arith.constant 0 : i32
    %c0_i32_0 = arith.constant 0 : i32
    %c0_i32_1 = arith.constant 0 : i32
    return %arg0, %c0_i32, %c0_i32_0 : i32, i32, i32
  }
  func.func @transform_6(%arg0: i32) -> (i32, i32, i32) {
    %c0_i32 = arith.constant 0 : i32
    %c0_i32_0 = arith.constant 0 : i32
    %c0_i32_1 = arith.constant 0 : i32
    return %arg0, %c0_i32, %c0_i32_0 : i32, i32, i32
  }
}

module attributes {stable_mosaic.version = 11 : i64} {
  func.func @_conv_stage_kernel(%arg0: i32, %arg1: memref<1x16x128xbf16, #tpu.memory_space<vmem>>, %arg2: memref<384x128xbf16, #tpu.memory_space<vmem>>, %arg3: memref<1x128xf32, #tpu.memory_space<vmem>>, %arg4: memref<1x128xf32, #tpu.memory_space<vmem>>, %arg5: memref<1x16x128xbf16, #tpu.memory_space<vmem>>, %arg6: memref<1x1x128xf32, #tpu.memory_space<vmem>>, %arg7: memref<1x1x128xf32, #tpu.memory_space<vmem>>) attributes {dimension_semantics = [#tpu.dimension_semantics<parallel>], iteration_bounds = array<i64: 2>, scalar_prefetch = 0 : i64, scratch_operands = 0 : i64, tpu.core_type = #tpu.core_type<tc>, window_params = [{transform_indices = @transform_0, window_bounds = array<i64: 1, 16, 128>}, {pipeline_mode = #tpu.pipeline_mode<synchronous>, transform_indices = @transform_1, window_bounds = array<i64: 384, 128>}, {pipeline_mode = #tpu.pipeline_mode<synchronous>, transform_indices = @transform_2, window_bounds = array<i64: 1, 128>}, {pipeline_mode = #tpu.pipeline_mode<synchronous>, transform_indices = @transform_3, window_bounds = array<i64: 1, 128>}, {transform_indices = @transform_4, window_bounds = array<i64: 1, 16, 128>}, {transform_indices = @transform_5, window_bounds = array<i64: 1, 1, 128>}, {transform_indices = @transform_6, window_bounds = array<i64: 1, 1, 128>}]} {
    %c0 = arith.constant 0 : index
    %c0_0 = arith.constant 0 : index
    %c0_1 = arith.constant 0 : index
    %0 = vector.load %arg1[%c0, %c0_0, %c0_1] : memref<1x16x128xbf16, #tpu.memory_space<vmem>>, vector<1x16x128xbf16>
    %1 = vector.shape_cast %0 : vector<1x16x128xbf16> to vector<16x128xbf16>
    %2 = arith.extf %1 : vector<16x128xbf16> to vector<16x128xf32>
    %c0_2 = arith.constant 0 : index
    %c0_3 = arith.constant 0 : index
    %3 = vector.load %arg3[%c0_2, %c0_3] : memref<1x128xf32, #tpu.memory_space<vmem>>, vector<1x128xf32>
    %4 = vector.broadcast %3 : vector<1x128xf32> to vector<16x128xf32>
    %5 = arith.mulf %2, %4 : vector<16x128xf32>
    %c0_4 = arith.constant 0 : index
    %c0_5 = arith.constant 0 : index
    %6 = vector.load %arg4[%c0_4, %c0_5] : memref<1x128xf32, #tpu.memory_space<vmem>>, vector<1x128xf32>
    %7 = vector.broadcast %6 : vector<1x128xf32> to vector<16x128xf32>
    %8 = arith.addf %5, %7 : vector<16x128xf32>
    %cst = arith.constant 0.000000e+00 : f32
    %9 = vector.broadcast %cst : f32 to vector<16x128xf32>
    %10 = arith.maximumf %8, %9 : vector<16x128xf32>
    %11 = tpu.iota {dimensions = array<i32: 0>} : vector<16x1xi32>
    %c1_i32 = arith.constant 1 : i32
    %12 = vector.broadcast %c1_i32 : i32 to vector<16x1xi32>
    %13 = arith.cmpi sge, %11, %12 : vector<16x1xi32>
    %c1_i32_6 = arith.constant 1 : i32
    %14 = tpu.dynamic_rotate %10 by %c1_i32_6 dim 0 : vector<16x128xf32>, i32 -> vector<16x128xf32>
    %cst_7 = arith.constant 0.000000e+00 : f32
    %15 = vector.shape_cast %13 : vector<16x1xi1> to vector<16x1xi1>
    %16 = vector.broadcast %15 : vector<16x1xi1> to vector<16x128xi1>
    %17 = vector.broadcast %cst_7 : f32 to vector<16x128xf32>
    %18 = arith.select %16, %14, %17 : vector<16x128xi1>, vector<16x128xf32>
    %c15_i32 = arith.constant 15 : i32
    %19 = vector.broadcast %c15_i32 : i32 to vector<16x1xi32>
    %20 = arith.cmpi slt, %11, %19 : vector<16x1xi32>
    %c15_i32_8 = arith.constant 15 : i32
    %21 = tpu.dynamic_rotate %10 by %c15_i32_8 dim 0 : vector<16x128xf32>, i32 -> vector<16x128xf32>
    %cst_9 = arith.constant 0.000000e+00 : f32
    %22 = vector.shape_cast %20 : vector<16x1xi1> to vector<16x1xi1>
    %23 = vector.broadcast %22 : vector<16x1xi1> to vector<16x128xi1>
    %24 = vector.broadcast %cst_9 : f32 to vector<16x128xf32>
    %25 = arith.select %23, %21, %24 : vector<16x128xi1>, vector<16x128xf32>
    %26 = arith.truncf %18 : vector<16x128xf32> to vector<16x128xbf16>
    %27 = arith.truncf %10 : vector<16x128xf32> to vector<16x128xbf16>
    %28 = arith.truncf %25 : vector<16x128xf32> to vector<16x128xbf16>
    %29 = tpu.concatenate %26, %27, %28 in 1 : vector<16x128xbf16>, vector<16x128xbf16>, vector<16x128xbf16> -> vector<16x384xbf16>
    %c0_10 = arith.constant 0 : index
    %c0_11 = arith.constant 0 : index
    %30 = vector.load %arg2[%c0_10, %c0_11] : memref<384x128xbf16, #tpu.memory_space<vmem>>, vector<384x128xbf16>
    %cst_12 = arith.constant dense<0.000000e+00> : vector<16x128xf32>
    %31 = tpu.matmul %29, %30, %cst_12 {dimension_numbers = #tpu.dot_dimension_numbers<[1], [0], [0], [1], [0, 0, 1, 1], [], []>} : vector<16x384xbf16>, vector<384x128xbf16>, vector<16x128xf32> -> vector<16x128xf32>
    %cst_13 = arith.constant dense<0.000000e+00> : vector<128xf32>
    %32 = vector.multi_reduction <add>, %31, %cst_13 [0] : vector<16x128xf32> to vector<128xf32>
    %33 = vector.shape_cast %32 : vector<128xf32> to vector<1x128xf32>
    %c0_14 = arith.constant 0 : index
    %c0_15 = arith.constant 0 : index
    %c0_16 = arith.constant 0 : index
    %34 = vector.load %arg6[%c0_14, %c0_15, %c0_16] : memref<1x1x128xf32, #tpu.memory_space<vmem>>, vector<1x1x128xf32>
    %35 = vector.shape_cast %34 : vector<1x1x128xf32> to vector<1x128xf32>
    %36 = vector.shape_cast %33 : vector<1x128xf32> to vector<1x1x128xf32>
    tpu.vector_store %arg6[%c0_14, %c0_15, %c0_16], %36 {strides = array<i32>} : memref<1x1x128xf32, #tpu.memory_space<vmem>>, vector<1x1x128xf32>,
    %37 = arith.mulf %31, %31 : vector<16x128xf32>
    %cst_17 = arith.constant dense<0.000000e+00> : vector<128xf32>
    %38 = vector.multi_reduction <add>, %37, %cst_17 [0] : vector<16x128xf32> to vector<128xf32>
    %39 = vector.shape_cast %38 : vector<128xf32> to vector<1x128xf32>
    %c0_18 = arith.constant 0 : index
    %c0_19 = arith.constant 0 : index
    %c0_20 = arith.constant 0 : index
    %40 = vector.load %arg7[%c0_18, %c0_19, %c0_20] : memref<1x1x128xf32, #tpu.memory_space<vmem>>, vector<1x1x128xf32>
    %41 = vector.shape_cast %40 : vector<1x1x128xf32> to vector<1x128xf32>
    %42 = vector.shape_cast %39 : vector<1x128xf32> to vector<1x1x128xf32>
    tpu.vector_store %arg7[%c0_18, %c0_19, %c0_20], %42 {strides = array<i32>} : memref<1x1x128xf32, #tpu.memory_space<vmem>>, vector<1x1x128xf32>,
    %43 = arith.truncf %31 : vector<16x128xf32> to vector<16x128xbf16>
    %c0_21 = arith.constant 0 : index
    %c0_22 = arith.constant 0 : index
    %c0_23 = arith.constant 0 : index
    %44 = vector.load %arg5[%c0_21, %c0_22, %c0_23] : memref<1x16x128xbf16, #tpu.memory_space<vmem>>, vector<1x16x128xbf16>
    %45 = vector.shape_cast %44 : vector<1x16x128xbf16> to vector<16x128xbf16>
    %46 = vector.shape_cast %43 : vector<16x128xbf16> to vector<1x16x128xbf16>
    tpu.vector_store %arg5[%c0_21, %c0_22, %c0_23], %46 {strides = array<i32>} : memref<1x16x128xbf16, #tpu.memory_space<vmem>>, vector<1x16x128xbf16>,
    return
  }
  func.func @transform_0(%arg0: i32) -> (i32, i32, i32) {
    %c0_i32 = arith.constant 0 : i32
    %c0_i32_0 = arith.constant 0 : i32
    %c0_i32_1 = arith.constant 0 : i32
    return %arg0, %c0_i32, %c0_i32_0 : i32, i32, i32
  }
  func.func @transform_1(%arg0: i32) -> (i32, i32) {
    %c0_i32 = arith.constant 0 : i32
    %c0_i32_0 = arith.constant 0 : i32
    %c0_i32_1 = arith.constant 0 : i32
    return %c0_i32, %c0_i32_0 : i32, i32
  }
  func.func @transform_2(%arg0: i32) -> (i32, i32) {
    %c0_i32 = arith.constant 0 : i32
    %c0_i32_0 = arith.constant 0 : i32
    %c0_i32_1 = arith.constant 0 : i32
    return %c0_i32, %c0_i32_0 : i32, i32
  }
  func.func @transform_3(%arg0: i32) -> (i32, i32) {
    %c0_i32 = arith.constant 0 : i32
    %c0_i32_0 = arith.constant 0 : i32
    %c0_i32_1 = arith.constant 0 : i32
    return %c0_i32, %c0_i32_0 : i32, i32
  }
  func.func @transform_4(%arg0: i32) -> (i32, i32, i32) {
    %c0_i32 = arith.constant 0 : i32
    %c0_i32_0 = arith.constant 0 : i32
    %c0_i32_1 = arith.constant 0 : i32
    return %arg0, %c0_i32, %c0_i32_0 : i32, i32, i32
  }
  func.func @transform_5(%arg0: i32) -> (i32, i32, i32) {
    %c0_i32 = arith.constant 0 : i32
    %c0_i32_0 = arith.constant 0 : i32
    %c0_i32_1 = arith.constant 0 : i32
    return %arg0, %c0_i32, %c0_i32_0 : i32, i32, i32
  }
  func.func @transform_6(%arg0: i32) -> (i32, i32, i32) {
    %c0_i32 = arith.constant 0 : i32
    %c0_i32_0 = arith.constant 0 : i32
    %c0_i32_1 = arith.constant 0 : i32
    return %arg0, %c0_i32, %c0_i32_0 : i32, i32, i32
  }
}

module attributes {stable_mosaic.version = 11 : i64} {
  func.func @_bn_relu_kernel(%arg0: i32, %arg1: memref<1x16x128xbf16, #tpu.memory_space<vmem>>, %arg2: memref<1x128xf32, #tpu.memory_space<vmem>>, %arg3: memref<1x128xf32, #tpu.memory_space<vmem>>, %arg4: memref<1x16x128xf32, #tpu.memory_space<vmem>>) attributes {dimension_semantics = [#tpu.dimension_semantics<parallel>], iteration_bounds = array<i64: 2>, scalar_prefetch = 0 : i64, scratch_operands = 0 : i64, tpu.core_type = #tpu.core_type<tc>, window_params = [{transform_indices = @transform_0, window_bounds = array<i64: 1, 16, 128>}, {pipeline_mode = #tpu.pipeline_mode<synchronous>, transform_indices = @transform_1, window_bounds = array<i64: 1, 128>}, {pipeline_mode = #tpu.pipeline_mode<synchronous>, transform_indices = @transform_2, window_bounds = array<i64: 1, 128>}, {transform_indices = @transform_3, window_bounds = array<i64: 1, 16, 128>}]} {
    %c0 = arith.constant 0 : index
    %c0_0 = arith.constant 0 : index
    %c0_1 = arith.constant 0 : index
    %0 = vector.load %arg1[%c0, %c0_0, %c0_1] : memref<1x16x128xbf16, #tpu.memory_space<vmem>>, vector<1x16x128xbf16>
    %1 = vector.shape_cast %0 : vector<1x16x128xbf16> to vector<16x128xbf16>
    %2 = arith.extf %1 : vector<16x128xbf16> to vector<16x128xf32>
    %c0_2 = arith.constant 0 : index
    %c0_3 = arith.constant 0 : index
    %3 = vector.load %arg2[%c0_2, %c0_3] : memref<1x128xf32, #tpu.memory_space<vmem>>, vector<1x128xf32>
    %4 = vector.broadcast %3 : vector<1x128xf32> to vector<16x128xf32>
    %5 = arith.mulf %2, %4 : vector<16x128xf32>
    %c0_4 = arith.constant 0 : index
    %c0_5 = arith.constant 0 : index
    %6 = vector.load %arg3[%c0_4, %c0_5] : memref<1x128xf32, #tpu.memory_space<vmem>>, vector<1x128xf32>
    %7 = vector.broadcast %6 : vector<1x128xf32> to vector<16x128xf32>
    %8 = arith.addf %5, %7 : vector<16x128xf32>
    %cst = arith.constant 0.000000e+00 : f32
    %9 = vector.broadcast %cst : f32 to vector<16x128xf32>
    %10 = arith.maximumf %8, %9 : vector<16x128xf32>
    %c0_6 = arith.constant 0 : index
    %c0_7 = arith.constant 0 : index
    %c0_8 = arith.constant 0 : index
    %11 = vector.load %arg4[%c0_6, %c0_7, %c0_8] : memref<1x16x128xf32, #tpu.memory_space<vmem>>, vector<1x16x128xf32>
    %12 = vector.shape_cast %11 : vector<1x16x128xf32> to vector<16x128xf32>
    %13 = vector.shape_cast %10 : vector<16x128xf32> to vector<1x16x128xf32>
    tpu.vector_store %arg4[%c0_6, %c0_7, %c0_8], %13 {strides = array<i32>} : memref<1x16x128xf32, #tpu.memory_space<vmem>>, vector<1x16x128xf32>,
    return
  }
  func.func @transform_0(%arg0: i32) -> (i32, i32, i32) {
    %c0_i32 = arith.constant 0 : i32
    %c0_i32_0 = arith.constant 0 : i32
    %c0_i32_1 = arith.constant 0 : i32
    return %arg0, %c0_i32, %c0_i32_0 : i32, i32, i32
  }
  func.func @transform_1(%arg0: i32) -> (i32, i32) {
    %c0_i32 = arith.constant 0 : i32
    %c0_i32_0 = arith.constant 0 : i32
    %c0_i32_1 = arith.constant 0 : i32
    return %c0_i32, %c0_i32_0 : i32, i32
  }
  func.func @transform_2(%arg0: i32) -> (i32, i32) {
    %c0_i32 = arith.constant 0 : i32
    %c0_i32_0 = arith.constant 0 : i32
    %c0_i32_1 = arith.constant 0 : i32
    return %c0_i32, %c0_i32_0 : i32, i32
  }
  func.func @transform_3(%arg0: i32) -> (i32, i32, i32) {
    %c0_i32 = arith.constant 0 : i32
    %c0_i32_0 = arith.constant 0 : i32
    %c0_i32_1 = arith.constant 0 : i32
    return %arg0, %c0_i32, %c0_i32_0 : i32, i32, i32
  }
}

</mosaic_0001>

<llo_original>
// kernel: double_conv.3
$region0: #{double_conv.3}
  #allocation0 [shape = 'u32[]', space=smem, size = 0x4, offset = 0x4, fixed_abs, tag = 'smem constant byte address 0x4 - core index']
  #allocation1 [shape = 'u32[144,128]{1,0:T(1,128)}', space=vmem, size = 0x12000, scoped, tag = 'internal scratch']
  %s0 = inlined_call_operand.vmem [shape: f32[2,16,128], index: 0, kind: input, shape index: {}]
  %s1 = inlined_call_operand.vmem [shape: bf16[384,128], index: 1, kind: input, shape index: {}]
  %s2 = inlined_call_operand.vmem [shape: f32[1,128], index: 2, kind: input, shape index: {}]
  %s3 = inlined_call_operand.vmem [shape: f32[1,128], index: 3, kind: input, shape index: {}]
  %s4 = inlined_call_operand.vmem [shape: bf16[2,16,128], index: 4, kind: output, shape index: {0}]
  %s5 = inlined_call_operand.vmem [shape: f32[2,1,128], index: 5, kind: output, shape index: {1}]
  %s6 = inlined_call_operand.vmem [shape: f32[2,1,128], index: 6, kind: output, shape index: {2}]
  %7 = xla_tuple %s4, %s5, %s6
  %s8 = sld [smem:[#allocation0]]
  $region65: #{double_conv.3} parent=0
    _
  %s10 = ssub.s32 1, %s8
  %s11 = scalar_select 0, %s10, %s8
  loop: start=0, step=1, limit=4
  $region2: #{double_conv.3} parent=0 // loop_pre_header
    _
  $region3: #{double_conv.3} parent=0 // loop_header
    %s13 = sphi 0, %s17
    %p14 = scmp.ge.s32.totalorder %s13, 4
    %s23 = sphi 0, %s25
    %s26 = sphi 0, %s23
    %s27 = sphi 0, %s26
    %s43 = sphi 0, %s27
    %s47 = sphi 0, %s47
    %s49 = sphi 0, %s47
    %s50 = sphi 0, %s49
    %s64 = sphi 0, %s50
    %s68 = sphi 0, %s68
    %s70 = sphi 0, %s68
    %s71 = sphi 0, %s70
    %s85 = sphi 0, %s71
    %s89 = sphi 0, %s89
    %s91 = sphi 0, %s89
    %s92 = sphi 0, %s91
    %s106 = sphi 0, %s92
    %s112 = sphi 0, %s114
    %s115 = sphi 0, %s112
    %s116 = sphi 0, %s115
    %s132 = sphi 0, %s116
    %s138 = sphi 0, %s140
    %s141 = sphi 0, %s138
    %s142 = sphi 0, %s141
    %s158 = sphi 0, %s142
    %s164 = sphi 0, %s166
    %s167 = sphi 0, %s164
    %s168 = sphi 0, %s167
    %s184 = sphi 0, %s168
  $region4: #{double_conv.3} parent=0 // loop_header_branch
    %16 = sbr.rel (%p14) target = $region8
  $region5: #{double_conv.3} parent=0 // loop_body
    %s18 = ssub.s32 %s13, 1
    %s19 = ssub.s32 %s13, 2
    %s20 = sadd.s32 %s13, 1
    %s21 = ssub.s32 %s13, %s20
    %p22 = scmp.eq.s32.totalorder %s21, 0
    %s24 = sadd.s32 %s23, 1
    %s25 = scalar_select %p22, %s23, %s24
    %p28 = pneg %p22
    %p29 = scmp.eq.s32.totalorder %s13, 1
    %p30 = por %p28, %p29
    %p31 = scmp.ne.s32.totalorder %s23, %s26
    %p32 = scmp.eq.s32.totalorder %s13, 0
    %p33 = por %p31, %p32
    %p34 = scmp.ne.s32.totalorder %s23, %s26
    %p35 = scmp.eq.s32.totalorder %s18, 1
    %p36 = por %p34, %p35
    %p37 = scmp.ne.s32.totalorder %s26, %s27
    %p38 = scmp.eq.s32.totalorder %s18, 0
    %p39 = por %p37, %p38
    %p40 = scmp.ne.s32.totalorder %s26, %s27
    %p41 = scmp.eq.s32.totalorder %s19, 1
    %p42 = por %p40, %p41
    %p44 = scmp.ne.s32.totalorder %s27, %s43
    %p45 = scmp.eq.s32.totalorder %s19, 0
    %p46 = por %p44, %p45
    %s48 = sadd.s32 %s47, 1
    %p51 = scmp.eq.s32.totalorder %s13, 1
    %p52 = scmp.ne.s32.totalorder %s47, %s49
    %p53 = scmp.eq.s32.totalorder %s13, 0
    %p54 = por %p52, %p53
    %p55 = scmp.ne.s32.totalorder %s47, %s49
    %p56 = scmp.eq.s32.totalorder %s18, 1
    %p57 = por %p55, %p56
    %p58 = scmp.ne.s32.totalorder %s49, %s50
    %p59 = scmp.eq.s32.totalorder %s18, 0
    %p60 = por %p58, %p59
    %p61 = scmp.ne.s32.totalorder %s49, %s50
    %p62 = scmp.eq.s32.totalorder %s19, 1
    %p63 = por %p61, %p62
    %p65 = scmp.ne.s32.totalorder %s50, %s64
    %p66 = scmp.eq.s32.totalorder %s19, 0
    %p67 = por %p65, %p66
    %s69 = sadd.s32 %s68, 1
    %p72 = scmp.eq.s32.totalorder %s13, 1
    %p73 = scmp.ne.s32.totalorder %s68, %s70
    %p74 = scmp.eq.s32.totalorder %s13, 0
    %p75 = por %p73, %p74
    %p76 = scmp.ne.s32.totalorder %s68, %s70
    %p77 = scmp.eq.s32.totalorder %s18, 1
    %p78 = por %p76, %p77
    %p79 = scmp.ne.s32.totalorder %s70, %s71
    %p80 = scmp.eq.s32.totalorder %s18, 0
    %p81 = por %p79, %p80
    %p82 = scmp.ne.s32.totalorder %s70, %s71
    %p83 = scmp.eq.s32.totalorder %s19, 1
    %p84 = por %p82, %p83
    %p86 = scmp.ne.s32.totalorder %s71, %s85
    %p87 = scmp.eq.s32.totalorder %s19, 0
    %p88 = por %p86, %p87
    %s90 = sadd.s32 %s89, 1
    %p93 = scmp.eq.s32.totalorder %s13, 1
    %p94 = scmp.ne.s32.totalorder %s89, %s91
    %p95 = scmp.eq.s32.totalorder %s13, 0
    %p96 = por %p94, %p95
    %p97 = scmp.ne.s32.totalorder %s89, %s91
    %p98 = scmp.eq.s32.totalorder %s18, 1
    %p99 = por %p97, %p98
    %p100 = scmp.ne.s32.totalorder %s91, %s92
    %p101 = scmp.eq.s32.totalorder %s18, 0
    %p102 = por %p100, %p101
    %p103 = scmp.ne.s32.totalorder %s91, %s92
    %p104 = scmp.eq.s32.totalorder %s19, 1
    %p105 = por %p103, %p104
    %p107 = scmp.ne.s32.totalorder %s92, %s106
    %p108 = scmp.eq.s32.totalorder %s19, 0
    %p109 = por %p107, %p108
    %s110 = ssub.s32 %s13, %s20
    %p111 = scmp.eq.s32.totalorder %s110, 0
    %s113 = sadd.s32 %s112, 1
    %s114 = scalar_select %p111, %s112, %s113
    %p117 = pneg %p111
    %p118 = scmp.eq.s32.totalorder %s13, 1
    %p119 = por %p117, %p118
    %p120 = scmp.ne.s32.totalorder %s112, %s115
    %p121 = scmp.eq.s32.totalorder %s13, 0
    %p122 = por %p120, %p121
    %p123 = scmp.ne.s32.totalorder %s112, %s115
    %p124 = scmp.eq.s32.totalorder %s18, 1
    %p125 = por %p123, %p124
    %p126 = scmp.ne.s32.totalorder %s115, %s116
    %p127 = scmp.eq.s32.totalorder %s18, 0
    %p128 = por %p126, %p127
    %p129 = scmp.ne.s32.totalorder %s115, %s116
    %p130 = scmp.eq.s32.totalorder %s19, 1
    %p131 = por %p129, %p130
    %p133 = scmp.ne.s32.totalorder %s116, %s132
    %p134 = scmp.eq.s32.totalorder %s19, 0
    %p135 = por %p133, %p134
    %s136 = ssub.s32 %s13, %s20
    %p137 = scmp.eq.s32.totalorder %s136, 0
    %s139 = sadd.s32 %s138, 1
    %s140 = scalar_select %p137, %s138, %s139
    %p143 = pneg %p137
    %p144 = scmp.eq.s32.totalorder %s13, 1
    %p145 = por %p143, %p144
    %p146 = scmp.ne.s32.totalorder %s138, %s141
    %p147 = scmp.eq.s32.totalorder %s13, 0
    %p148 = por %p146, %p147
    %p149 = scmp.ne.s32.totalorder %s138, %s141
    %p150 = scmp.eq.s32.totalorder %s18, 1
    %p151 = por %p149, %p150
    %p152 = scmp.ne.s32.totalorder %s141, %s142
    %p153 = scmp.eq.s32.totalorder %s18, 0
    %p154 = por %p152, %p153
    %p155 = scmp.ne.s32.totalorder %s141, %s142
    %p156 = scmp.eq.s32.totalorder %s19, 1
    %p157 = por %p155, %p156
    %p159 = scmp.ne.s32.totalorder %s142, %s158
    %p160 = scmp.eq.s32.totalorder %s19, 0
    %p161 = por %p159, %p160
    %s162 = ssub.s32 %s13, %s20
    %p163 = scmp.eq.s32.totalorder %s162, 0
    %s165 = sadd.s32 %s164, 1
    %s166 = scalar_select %p163, %s164, %s165
    %p169 = pneg %p163
    %p170 = scmp.eq.s32.totalorder %s13, 1
    %p171 = por %p169, %p170
    %p172 = scmp.ne.s32.totalorder %s164, %s167
    %p173 = scmp.eq.s32.totalorder %s13, 0
    %p174 = por %p172, %p173
    %p175 = scmp.ne.s32.totalorder %s164, %s167
    %p176 = scmp.eq.s32.totalorder %s18, 1
    %p177 = por %p175, %p176
    %p178 = scmp.ne.s32.totalorder %s167, %s168
    %p179 = scmp.eq.s32.totalorder %s18, 0
    %p180 = por %p178, %p179
    %p181 = scmp.ne.s32.totalorder %s167, %s168
    %p182 = scmp.eq.s32.totalorder %s19, 1
    %p183 = por %p181, %p182
    %p185 = scmp.ne.s32.totalorder %s168, %s184
    %p186 = scmp.eq.s32.totalorder %s19, 0
    %p187 = por %p185, %p186
    %p188 = scmp.le.s32.totalorder 1, %s13
    %p189 = scmp.lt.s32.totalorder %s13, 3
    %p190 = pnand %p188, %p189
    %p191 = pneg %p190
    // Predicated region
    $region9: #{double_conv.3} parent=5 // pred_check
      _
    $region10: #{double_conv.3} parent=5 // pred_check_branch
      %193 = sbr.rel (%p190) target = $region12
    $region11: #{double_conv.3} parent=5 // pred_region
      %s194 = ssub.s32 %s13, 1
      // Predicated region
      $region13: #{double_conv.3} parent=11 // pred_check
        %p195 = pneg %p60
      $region14: #{double_conv.3} parent=11 // pred_check_branch
        %197 = sbr.rel (%p195) target = $region16
      $region15: #{double_conv.3} parent=11 // pred_region
        _
      $region16: #{double_conv.3} parent=11 // pred_fallthru
        _
      // Predicated region
      $region17: #{double_conv.3} parent=11 // pred_check
        %p198 = pneg %p81
      $region18: #{double_conv.3} parent=11 // pred_check_branch
        %200 = sbr.rel (%p198) target = $region20
      $region19: #{double_conv.3} parent=11 // pred_region
        _
      $region20: #{double_conv.3} parent=11 // pred_fallthru
        _
      // Predicated region
      $region21: #{double_conv.3} parent=11 // pred_check
        %p201 = pneg %p102
      $region22: #{double_conv.3} parent=11 // pred_check_branch
        %203 = sbr.rel (%p201) target = $region24
      $region23: #{double_conv.3} parent=11 // pred_region
        _
      $region24: #{double_conv.3} parent=11 // pred_fallthru
        _
    $region12: #{double_conv.3} parent=5 // pred_fallthru
      _
    %p204 = scmp.lt.s32.totalorder %s13, 2
    // Predicated region
    $region25: #{double_conv.3} parent=5 // pred_check
      %p205 = pneg %p204
    $region26: #{double_conv.3} parent=5 // pred_check_branch
      %207 = sbr.rel (%p205) target = $region28
    $region27: #{double_conv.3} parent=5 // pred_region
      // Predicated region
      $region29: #{double_conv.3} parent=27 // pred_check
        %p208 = pneg %p33
      $region30: #{double_conv.3} parent=27 // pred_check_branch
        %210 = sbr.rel (%p208) target = $region32
      $region31: #{double_conv.3} parent=27 // pred_region
        %p211 = scmp.lt.s32.totalorder %s13, 1
        %s212 = scalar_select %p211, %s13, 1
        %s213 = smul.addr %s212, 2
        %s214 = smul.addr %s213, 8
        %s215 = scalar_lea.vmem %s0, %s214
      $region32: #{double_conv.3} parent=27 // pred_fallthru
        _
    $region28: #{double_conv.3} parent=5 // pred_fallthru
      _
    %p216 = scmp.le.s32.totalorder 1, %s13
    %p217 = scmp.lt.s32.totalorder %s13, 3
    %p218 = pnand %p216, %p217
    %p219 = pneg %p218
    // Predicated region
    $region33: #{double_conv.3} parent=5 // pred_check
      _
    $region34: #{double_conv.3} parent=5 // pred_check_branch
      %221 = sbr.rel (%p218) target = $region36
    $region35: #{double_conv.3} parent=5 // pred_region
      %s222 = ssub.s32 %s13, 1
      %p223 = scmp.lt.s32.totalorder %s18, 1
      %s224 = scalar_select %p223, %s18, 1
      %s225 = smul.addr %s224, 2
      %s226 = smul.addr %s225, 8
      %s227 = scalar_lea.vmem %s0, %s226
      %p228 = pneg %p39
      %p229 = pneg %p36
      %p230 = pneg %p60
      %p231 = pneg %p57
      %p232 = pneg %p81
      %p233 = pneg %p78
      %p234 = pneg %p102
      %p235 = pneg %p99
      %p236 = pneg %p128
      %p237 = pneg %p125
      %p238 = scmp.lt.s32.totalorder %s18, 1
      %s239 = scalar_select %p238, %s18, 1
      %s240 = smul.addr %s239, 2
      %s241 = smul.addr %s240, 4
      %s242 = scalar_lea.vmem %s4, %s241
      %p243 = pneg %p154
      %p244 = pneg %p151
      %p245 = scmp.lt.s32.totalorder %s18, 1
      %s246 = scalar_select %p245, %s18, 1
      %s247 = scalar_lea.vmem %s5, %s246
      %p248 = pneg %p180
      %p249 = pneg %p177
      %p250 = scmp.lt.s32.totalorder %s18, 1
      %s251 = scalar_select %p250, %s18, 1
      %s252 = scalar_lea.vmem %s6, %s251
      %p253 = scmp.lt.s32.totalorder %s18, 1
      %s254 = scalar_select %p253, %s18, 1
      %s255 = smul.addr %s254, 2
      %s256 = smul.addr %s255, 8
      %s257 = scalar_lea.vmem %s0, %s256
      %p258 = scmp.lt.s32.totalorder %s18, 1
      %s259 = scalar_select %p258, %s18, 1
      %s260 = smul.addr %s259, 2
      %s261 = smul.addr %s260, 4
      %s262 = scalar_lea.vmem %s4, %s261
      %p263 = scmp.lt.s32.totalorder %s18, 1
      %s264 = scalar_select %p263, %s18, 1
      %s265 = scalar_lea.vmem %s5, %s264
      %p266 = scmp.lt.s32.totalorder %s18, 1
      %s267 = scalar_select %p266, %s18, 1
      %s268 = scalar_lea.vmem %s6, %s267
      %v270 = vld [vmem:[%s257] sm:$0xff]
      %v271 = vld [vmem:[%s257 + $0x8] sm:$0xff]
      %v272 = vlaneseq
      %v273 = vshrl.u32 %v272, 7
      %v274 = vadd.s32 %v273, 8
      %vm275 = vcmp.ge.s32.totalorder %v273, 1
      %vm276 = vcmp.ge.s32.totalorder %v274, 1
      %v277 = vrot.slane %v270, 7
      %v278 = vrot.slane %v271, 7
      %vm279 = vcmp.lt.s32.totalorder %v273, 1
      %v280 = vsel %vm279, %v277, %v278
      %v281 = vsel %vm279, %v278, %v277
      %v282 = vsel %vm275, 1, 0
      %v283 = vsel %vm276, 1, 0
      %vm284 = vcmp.eq.s32.totalorder %v282, 1
      %vm285 = vcmp.eq.s32.totalorder %v283, 1
      %v286 = vsel %vm284, %v281, 0.0
      %v287 = vsel %vm285, %v280, 0.0
      %vm288 = vcmp.lt.s32.totalorder %v273, 15
      %vm289 = vcmp.lt.s32.totalorder %v274, 15
      %v290 = vrot.slane %v270, 1
      %v291 = vrot.slane %v271, 1
      %vm292 = vcmp.lt.s32.totalorder %v273, 7
      %v293 = vsel %vm292, %v290, %v291
      %v294 = vsel %vm292, %v291, %v290
      %v295 = vsel %vm288, 1, 0
      %v296 = vsel %vm289, 1, 0
      %vm297 = vcmp.eq.s32.totalorder %v295, 1
      %vm298 = vcmp.eq.s32.totalorder %v296, 1
      %v299 = vsel %vm297, %v293, 0.0
      %v300 = vsel %vm298, %v294, 0.0
      %v301 = vpack.c.bf16 %v287, %v286
      %v302 = vpack.c.bf16 %v271, %v270
      %v303 = vpack.c.bf16 %v300, %v299
      %v304 = vld [vmem:[%s1] sm:$0xf]
      %v305 = vld [vmem:[%s1 + $0x4] sm:$0xf]
      %v306 = vld [vmem:[%s1 + $0x8] sm:$0xf]
      %v307 = vld [vmem:[%s1 + $0xc] sm:$0xf]
      %v308 = vld [vmem:[%s1 + $0x10] sm:$0xf]
      %v309 = vld [vmem:[%s1 + $0x14] sm:$0xf]
      %v310 = vld [vmem:[%s1 + $0x18] sm:$0xf]
      %v311 = vld [vmem:[%s1 + $0x1c] sm:$0xf]
      %v312 = vld [vmem:[%s1 + $0x20] sm:$0xf]
      %v313 = vld [vmem:[%s1 + $0x24] sm:$0xf]
      %v314 = vld [vmem:[%s1 + $0x28] sm:$0xf]
      %v315 = vld [vmem:[%s1 + $0x2c] sm:$0xf]
      %v316 = vld [vmem:[%s1 + $0x30] sm:$0xf]
      %v317 = vld [vmem:[%s1 + $0x34] sm:$0xf]
      %v318 = vld [vmem:[%s1 + $0x38] sm:$0xf]
      %v319 = vld [vmem:[%s1 + $0x3c] sm:$0xf]
      %v320 = vld [vmem:[%s1 + $0x40] sm:$0xf]
      %v321 = vld [vmem:[%s1 + $0x44] sm:$0xf]
      %v322 = vld [vmem:[%s1 + $0x48] sm:$0xf]
      %v323 = vld [vmem:[%s1 + $0x4c] sm:$0xf]
      %v324 = vld [vmem:[%s1 + $0x50] sm:$0xf]
      %v325 = vld [vmem:[%s1 + $0x54] sm:$0xf]
      %v326 = vld [vmem:[%s1 + $0x58] sm:$0xf]
      %v327 = vld [vmem:[%s1 + $0x5c] sm:$0xf]
      %v328 = vld [vmem:[%s1 + $0x60] sm:$0xf]
      %v329 = vld [vmem:[%s1 + $0x64] sm:$0xf]
      %v330 = vld [vmem:[%s1 + $0x68] sm:$0xf]
      %v331 = vld [vmem:[%s1 + $0x6c] sm:$0xf]
      %v332 = vld [vmem:[%s1 + $0x70] sm:$0xf]
      %v333 = vld [vmem:[%s1 + $0x74] sm:$0xf]
      %v334 = vld [vmem:[%s1 + $0x78] sm:$0xf]
      %v335 = vld [vmem:[%s1 + $0x7c] sm:$0xf]
      %v336 = vld [vmem:[%s1 + $0x80] sm:$0xf]
      %v337 = vld [vmem:[%s1 + $0x84] sm:$0xf]
      %v338 = vld [vmem:[%s1 + $0x88] sm:$0xf]
      %v339 = vld [vmem:[%s1 + $0x8c] sm:$0xf]
      %v340 = vld [vmem:[%s1 + $0x90] sm:$0xf]
      %v341 = vld [vmem:[%s1 + $0x94] sm:$0xf]
      %v342 = vld [vmem:[%s1 + $0x98] sm:$0xf]
      %v343 = vld [vmem:[%s1 + $0x9c] sm:$0xf]
      %v344 = vld [vmem:[%s1 + $0xa0] sm:$0xf]
      %v345 = vld [vmem:[%s1 + $0xa4] sm:$0xf]
      %v346 = vld [vmem:[%s1 + $0xa8] sm:$0xf]
      %v347 = vld [vmem:[%s1 + $0xac] sm:$0xf]
      %v348 = vld [vmem:[%s1 + $0xb0] sm:$0xf]
      %v349 = vld [vmem:[%s1 + $0xb4] sm:$0xf]
      %v350 = vld [vmem:[%s1 + $0xb8] sm:$0xf]
      %v351 = vld [vmem:[%s1 + $0xbc] sm:$0xf]
      %v400 = vunpack.c.l.b16 %v304
      %v401 = vunpack.c.l.b16 %v305
      %v402 = vunpack.c.l.b16 %v306
      %v403 = vunpack.c.l.b16 %v307
      %v404 = vunpack.c.l.b16 %v308
      %v405 = vunpack.c.l.b16 %v309
      %v406 = vunpack.c.l.b16 %v310
      %v407 = vunpack.c.l.b16 %v311
      %v408 = vunpack.c.l.b16 %v312
      %v409 = vunpack.c.l.b16 %v313
      %v410 = vunpack.c.l.b16 %v314
      %v411 = vunpack.c.l.b16 %v315
      %v412 = vunpack.c.l.b16 %v316
      %v413 = vunpack.c.l.b16 %v317
      %v414 = vunpack.c.l.b16 %v318
      %v415 = vunpack.c.l.b16 %v319
      %v416 = vunpack.c.l.b16 %v320
      %v417 = vunpack.c.l.b16 %v321
      %v418 = vunpack.c.l.b16 %v322
      %v419 = vunpack.c.l.b16 %v323
      %v420 = vunpack.c.l.b16 %v324
      %v421 = vunpack.c.l.b16 %v325
      %v422 = vunpack.c.l.b16 %v326
      %v423 = vunpack.c.l.b16 %v327
      %v424 = vunpack.c.l.b16 %v328
      %v425 = vunpack.c.l.b16 %v329
      %v426 = vunpack.c.l.b16 %v330
      %v427 = vunpack.c.l.b16 %v331
      %v428 = vunpack.c.l.b16 %v332
      %v429 = vunpack.c.l.b16 %v333
      %v430 = vunpack.c.l.b16 %v334
      %v431 = vunpack.c.l.b16 %v335
      %v432 = vunpack.c.l.b16 %v336
      %v433 = vunpack.c.l.b16 %v337
      %v434 = vunpack.c.l.b16 %v338
      %v435 = vunpack.c.l.b16 %v339
      %v436 = vunpack.c.l.b16 %v340
      %v437 = vunpack.c.l.b16 %v341
      %v438 = vunpack.c.l.b16 %v342
      %v439 = vunpack.c.l.b16 %v343
      %v440 = vunpack.c.l.b16 %v344
      %v441 = vunpack.c.l.b16 %v345
      %v442 = vunpack.c.l.b16 %v346
      %v443 = vunpack.c.l.b16 %v347
      %v444 = vunpack.c.l.b16 %v348
      %v445 = vunpack.c.l.b16 %v349
      %v446 = vunpack.c.l.b16 %v350
      %v447 = vunpack.c.l.b16 %v351
      %v448 = vpack.c.b16 %v401, %v400
      %v449 = vpack.c.b16 %v403, %v402
      %v450 = vpack.c.b16 %v405, %v404
      %v451 = vpack.c.b16 %v407, %v406
      %v452 = vpack.c.b16 %v409, %v408
      %v453 = vpack.c.b16 %v411, %v410
      %v454 = vpack.c.b16 %v413, %v412
      %v455 = vpack.c.b16 %v415, %v414
      %v456 = vpack.c.b16 %v417, %v416
      %v457 = vpack.c.b16 %v419, %v418
      %v458 = vpack.c.b16 %v421, %v420
      %v459 = vpack.c.b16 %v423, %v422
      %v460 = vpack.c.b16 %v425, %v424
      %v461 = vpack.c.b16 %v427, %v426
      %v462 = vpack.c.b16 %v429, %v428
      %v463 = vpack.c.b16 %v431, %v430
      %v464 = vpack.c.b16 %v433, %v432
      %v465 = vpack.c.b16 %v435, %v434
      %v466 = vpack.c.b16 %v437, %v436
      %v467 = vpack.c.b16 %v439, %v438
      %v468 = vpack.c.b16 %v441, %v440
      %v469 = vpack.c.b16 %v443, %v442
      %v470 = vpack.c.b16 %v445, %v444
      %v471 = vpack.c.b16 %v447, %v446
      %496 = vmatprep.subr.bf16.mxu0 0
      %497 = vmatpush1.bf16.msra.mxu0 %v455
      %498 = vmatprep.subr.bf16.mxu0 0
      %499 = vmatpush1.bf16.msra.mxu0 %v454
      %500 = vmatprep.subr.bf16.mxu0 0
      %501 = vmatpush1.bf16.msra.mxu0 %v453
      %502 = vmatprep.subr.bf16.mxu0 0
      %503 = vmatpush1.bf16.msra.mxu0 %v452
      %504 = vmatprep.subr.bf16.mxu0 0
      %505 = vmatpush1.bf16.msra.mxu0 %v451
      %506 = vmatprep.subr.bf16.mxu0 0
      %507 = vmatpush1.bf16.msra.mxu0 %v450
      %508 = vmatprep.subr.bf16.mxu0 0
      %509 = vmatpush1.bf16.msra.mxu0 %v449
      %510 = vmatprep.subr.bf16.mxu0 0
      %511 = vmatpush1.bf16.msra.mxu0 %v448
      %512 = vmatprep.subr.bf16.mxu0 0
      %513 = vmatpush2.bf16.msra.mxu0 %v463
      %514 = vmatprep.subr.bf16.mxu0 0
      %515 = vmatpush2.bf16.msra.mxu0 %v462
      %516 = vmatprep.subr.bf16.mxu0 0
      %517 = vmatpush2.bf16.msra.mxu0 %v461
      %518 = vmatprep.subr.bf16.mxu0 0
      %519 = vmatpush2.bf16.msra.mxu0 %v460
      %520 = vmatprep.subr.bf16.mxu0 0
      %521 = vmatpush2.bf16.msra.mxu0 %v459
      %522 = vmatprep.subr.bf16.mxu0 0
      %523 = vmatpush2.bf16.msra.mxu0 %v458
      %524 = vmatprep.subr.bf16.mxu0 0
      %525 = vmatpush2.bf16.msra.mxu0 %v457
      %526 = vmatprep.subr.bf16.mxu0 0
      %527 = vmatpush2.bf16.msra.mxu0 %v456
      %528 = vmatprep.mubr.bf16.mxu0 %v302
      %529 = vmatmul.mubr.bf16.gmra.mxu0 %v301
      %v530 = vpop.f32.mrf.mxu0
      %v531 = vadd.f32 0.0, %v530
      %v532 = vpop.f32.mrf.mxu0
      %v533 = vpop.f32.mrf.mxu0
      %v534 = vadd.f32 0.0, %v533
      %v535 = vpop.f32.mrf.mxu0
      %536 = vdwg.mxu0
      %537 = vmatprep.subr.bf16.mxu0 0
      %538 = vmatpush1.bf16.msra.mxu0 %v471
      %539 = vmatprep.subr.bf16.mxu0 0
      %540 = vmatpush1.bf16.msra.mxu0 %v470
      %541 = vmatprep.subr.bf16.mxu0 0
      %542 = vmatpush1.bf16.msra.mxu0 %v469
      %543 = vmatprep.subr.bf16.mxu0 0
      %544 = vmatpush1.bf16.msra.mxu0 %v468
      %545 = vmatprep.subr.bf16.mxu0 0
      %546 = vmatpush1.bf16.msra.mxu0 %v467
      %547 = vmatprep.subr.bf16.mxu0 0
      %548 = vmatpush1.bf16.msra.mxu0 %v466
      %549 = vmatprep.subr.bf16.mxu0 0
      %550 = vmatpush1.bf16.msra.mxu0 %v465
      %551 = vmatprep.subr.bf16.mxu0 0
      %552 = vmatpush1.bf16.msra.mxu0 %v464
      %553 = vmatprep.subr.bf16.mxu0 0
      %554 = vmatpush2.bf16.msra.mxu0 0
      %555 = vmatprep.subr.bf16.mxu0 0
      %556 = vmatpush2.bf16.msra.mxu0 0
      %557 = vmatprep.subr.bf16.mxu0 0
      %558 = vmatpush2.bf16.msra.mxu0 0
      %559 = vmatprep.subr.bf16.mxu0 0
      %560 = vmatpush2.bf16.msra.mxu0 0
      %561 = vmatprep.subr.bf16.mxu0 0
      %562 = vmatpush2.bf16.msra.mxu0 0
      %563 = vmatprep.subr.bf16.mxu0 0
      %564 = vmatpush2.bf16.msra.mxu0 0
      %565 = vmatprep.subr.bf16.mxu0 0
      %566 = vmatpush2.bf16.msra.mxu0 0
      %567 = vmatprep.subr.bf16.mxu0 0
      %568 = vmatpush2.bf16.msra.mxu0 0
      %569 = vmatprep.mubr.bf16.mxu0 0
      %570 = vmatmul.mubr.bf16.gmra.mxu0 %v303
      %v571 = vpop.f32.mrf.mxu0
      %v572 = vadd.f32 %v531, %v571
      %v573 = vpop.f32.mrf.mxu0
      %v574 = vpop.f32.mrf.mxu0
      %v575 = vadd.f32 %v534, %v574
      %v576 = vpop.f32.mrf.mxu0
      %577 = vdwg.mxu0
      %v578 = vadd.f32 %v572, %v575
      %v579 = vrot.slane %v578, 4
      %v580 = vadd.f32 %v578, %v579
      %v581 = vrot.slane %v580, 2
      %v582 = vadd.f32 %v580, %v581
      %v583 = vrot.slane %v582, 1
      %v584 = vadd.f32 %v582, %v583
      %585 = vst [vmem:[%s265] sm:$0x1] %v584
      %v586 = vmul.f32 %v572, %v572
      %v587 = vmul.f32 %v575, %v575
      %v588 = vadd.f32 %v586, %v587
      %v589 = vrot.slane %v588, 4
      %v590 = vadd.f32 %v588, %v589
      %v591 = vrot.slane %v590, 2
      %v592 = vadd.f32 %v590, %v591
      %v593 = vrot.slane %v592, 1
      %v594 = vadd.f32 %v592, %v593
      %595 = vst [vmem:[%s268] sm:$0x1] %v594
      %v596 = vpack.c.bf16 %v575, %v572
      %v598 = vunpack.c.l.b16 %v596
      %v599 = vunpack.c.h.b16 %v596
      %v600 = vpack.c.b16 %v598, %v598
      %v601 = vpack.c.b16 %v599, %v599
      %604 = vst [vmem:[%s262] sm:$0xf] %v600
      %605 = vst [vmem:[%s262 + $0x4] sm:$0xf] %v601
      %p606 = scmp.lt.s32.totalorder %s18, 1
      %s607 = scalar_select %p606, %s18, 1
      %s608 = smul.addr %s607, 2
      %s609 = smul.addr %s608, 4
      %s610 = scalar_lea.vmem %s4, %s609
      %p611 = scmp.lt.s32.totalorder %s18, 1
      %s612 = scalar_select %p611, %s18, 1
      %s613 = scalar_lea.vmem %s5, %s612
      %p614 = scmp.lt.s32.totalorder %s18, 1
      %s615 = scalar_select %p614, %s18, 1
      %s616 = scalar_lea.vmem %s6, %s615
      // Predicated region
      $region37: #{double_conv.3} parent=35 // pred_check
        %p617 = pneg %p125
      $region38: #{double_conv.3} parent=35 // pred_check_branch
        %619 = sbr.rel (%p617) target = $region40
      $region39: #{double_conv.3} parent=35 // pred_region
        _
      $region40: #{double_conv.3} parent=35 // pred_fallthru
        _
      // Predicated region
      $region41: #{double_conv.3} parent=35 // pred_check
        %p620 = pneg %p151
      $region42: #{double_conv.3} parent=35 // pred_check_branch
        %622 = sbr.rel (%p620) target = $region44
      $region43: #{double_conv.3} parent=35 // pred_region
        _
      $region44: #{double_conv.3} parent=35 // pred_fallthru
        _
      // Predicated region
      $region45: #{double_conv.3} parent=35 // pred_check
        %p623 = pneg %p177
      $region46: #{double_conv.3} parent=35 // pred_check_branch
        %625 = sbr.rel (%p623) target = $region48
      $region47: #{double_conv.3} parent=35 // pred_region
        _
      $region48: #{double_conv.3} parent=35 // pred_fallthru
        _
    $region36: #{double_conv.3} parent=5 // pred_fallthru
      _
    %p626 = scmp.le.s32.totalorder 2, %s13
    // Predicated region
    $region49: #{double_conv.3} parent=5 // pred_check
      %p627 = pneg %p626
    $region50: #{double_conv.3} parent=5 // pred_check_branch
      %629 = sbr.rel (%p627) target = $region52
    $region51: #{double_conv.3} parent=5 // pred_region
      %s630 = ssub.s32 %s13, 2
      // Predicated region
      $region53: #{double_conv.3} parent=51 // pred_check
        %p631 = pneg %p131
      $region54: #{double_conv.3} parent=51 // pred_check_branch
        %633 = sbr.rel (%p631) target = $region56
      $region55: #{double_conv.3} parent=51 // pred_region
        %p634 = scmp.lt.s32.totalorder %s19, 1
        %s635 = scalar_select %p634, %s19, 1
        %s636 = smul.addr %s635, 2
        %s637 = smul.addr %s636, 4
        %s638 = scalar_lea.vmem %s4, %s637
      $region56: #{double_conv.3} parent=51 // pred_fallthru
        _
      // Predicated region
      $region57: #{double_conv.3} parent=51 // pred_check
        %p639 = pneg %p157
      $region58: #{double_conv.3} parent=51 // pred_check_branch
        %641 = sbr.rel (%p639) target = $region60
      $region59: #{double_conv.3} parent=51 // pred_region
        %p642 = scmp.lt.s32.totalorder %s19, 1
        %s643 = scalar_select %p642, %s19, 1
        %s644 = scalar_lea.vmem %s5, %s643
      $region60: #{double_conv.3} parent=51 // pred_fallthru
        _
      // Predicated region
      $region61: #{double_conv.3} parent=51 // pred_check
        %p645 = pneg %p183
      $region62: #{double_conv.3} parent=51 // pred_check_branch
        %647 = sbr.rel (%p645) target = $region64
      $region63: #{double_conv.3} parent=51 // pred_region
        %p648 = scmp.lt.s32.totalorder %s19, 1
        %s649 = scalar_select %p648, %s19, 1
        %s650 = scalar_lea.vmem %s6, %s649
      $region64: #{double_conv.3} parent=51 // pred_fallthru
        _
    $region52: #{double_conv.3} parent=5 // pred_fallthru
      _
  $region6: #{double_conv.3} parent=0 // loop_footer
    %s17 = sadd.s32 1, %s13
  $region7: #{double_conv.3} parent=0 // loop_footer_branch
    %12 = sbr.rel target = $region3
  $region8: #{double_conv.3} parent=0 // loop_exit
    _

// kernel: tile.23
$region0: #{tile.23}
  #allocation0 [shape = 's32[1]{0}', space=sflag, size = 0x4, scoped, tag = 'scoped memory for tile.23']
  %s0 = inlined_call_operand.vmem [shape: f32[8], index: 0, kind: input, shape index: {}]
  %s1 = inlined_call_operand.vmem [shape: f32[16,8], index: 1, kind: output, shape index: {}]
  // Predicated region
  $region2: #{tile.23} parent=0 // pred_check
    _
  $region3: #{tile.23} parent=0 // pred_check_branch
    %3 = sbr.rel (0) target = $region5
  $region4: #{tile.23} parent=0 // pred_region
    _
  $region5: #{tile.23} parent=0 // pred_fallthru
    _
  %v4 = vld [vmem:[%s0] ss:$0 sm:$0xff]
  %5 = vst [vmem:[%s1] sm:$0xff] %v4
  %s6 = scalar_lea.vmem %s1, 8
  %7 = vst [vmem:[%s6] sm:$0xff] %v4

// kernel: tile.24
$region0: #{tile.24}
  %s0 = inlined_call_operand.vmem [shape: f32[16,8], index: 0, kind: input, shape index: {}]
  %s1 = inlined_call_operand.vmem [shape: f32[1,128], index: 1, kind: output, shape index: {}]
  $region1: #{tile.24} parent=0
    #allocation0 [shape = 'u8[4096]{0}', space=vmem, size = 0x1000, scoped, tag = 'scoped mem for output reshape']
    %v2 = vld [vmem:[%s0] sm:$0x1]
    %vm3 = vcmask 64512
    %4 = vst.msk [vmem:[#allocation0] sm:$0x1] %vm3, %v2
    %s5 = scalar_lea.vmem %s0, 15
    %v6 = vld [vmem:[%s5] sm:$0x1]
    %7 = vrot.lane.b32.xlu0 %v6, 120
    %v8 = vpop.permute.xlu0 %7
    %vm9 = vcmask 1048512
    %10 = vst.msk [vmem:[#allocation0] sm:$0x1] %vm9, %v8
    %s11 = scalar_lea.vmem %s0, 14
    %v12 = vld [vmem:[%s11] sm:$0x1]
    %13 = vrot.lane.b32.xlu0 %v12, 112
    %v14 = vpop.permute.xlu0 %13
    %vm15 = vcmask 982912
    %16 = vst.msk [vmem:[#allocation0] sm:$0x1] %vm15, %v14
    %s17 = scalar_lea.vmem %s0, 13
    %v18 = vld [vmem:[%s17] sm:$0x1]
    %19 = vrot.lane.b32.xlu0 %v18, 104
    %v20 = vpop.permute.xlu0 %19
    %vm21 = vcmask 917312
    %22 = vst.msk [vmem:[#allocation0] sm:$0x1] %vm21, %v20
    %s23 = scalar_lea.vmem %s0, 12
    %v24 = vld [vmem:[%s23] sm:$0x1]
    %25 = vrot.lane.b32.xlu0 %v24, 96
    %v26 = vpop.permute.xlu0 %25
    %vm27 = vcmask 851712
    %28 = vst.msk [vmem:[#allocation0] sm:$0x1] %vm27, %v26
    %s29 = scalar_lea.vmem %s0, 11
    %v30 = vld [vmem:[%s29] sm:$0x1]
    %31 = vrot.lane.b32.xlu0 %v30, 88
    %v32 = vpop.permute.xlu0 %31
    %vm33 = vcmask 786112
    %34 = vst.msk [vmem:[#allocation0] sm:$0x1] %vm33, %v32
    %s35 = scalar_lea.vmem %s0, 10
    %v36 = vld [vmem:[%s35] sm:$0x1]
    %37 = vrot.lane.b32.xlu0 %v36, 80
    %v38 = vpop.permute.xlu0 %37
    %vm39 = vcmask 720512
    %40 = vst.msk [vmem:[#allocation0] sm:$0x1] %vm39, %v38
    %s41 = scalar_lea.vmem %s0, 9
    %v42 = vld [vmem:[%s41] sm:$0x1]
    %43 = vrot.lane.b32.xlu0 %v42, 72
    %v44 = vpop.permute.xlu0 %43
    %vm45 = vcmask 654912
    %46 = vst.msk [vmem:[#allocation0] sm:$0x1] %vm45, %v44
    %s47 = scalar_lea.vmem %s0, 8
    %v48 = vld [vmem:[%s47] sm:$0x1]
    %49 = vrot.lane.b32.xlu0 %v48, 64
    %v50 = vpop.permute.xlu0 %49
    %vm51 = vcmask 589312
    %52 = vst.msk [vmem:[#allocation0] sm:$0x1] %vm51, %v50
    %s53 = scalar_lea.vmem %s0, 7
    %v54 = vld [vmem:[%s53] sm:$0x1]
    %55 = vrot.lane.b32.xlu0 %v54, 56
    %v56 = vpop.permute.xlu0 %55
    %vm57 = vcmask 523712
    %58 = vst.msk [vmem:[#allocation0] sm:$0x1] %vm57, %v56
    %s59 = scalar_lea.vmem %s0, 6
    %v60 = vld [vmem:[%s59] sm:$0x1]
    %61 = vrot.lane.b32.xlu0 %v60, 48
    %v62 = vpop.permute.xlu0 %61
    %vm63 = vcmask 458112
    %64 = vst.msk [vmem:[#allocation0] sm:$0x1] %vm63, %v62
    %s65 = scalar_lea.vmem %s0, 5
    %v66 = vld [vmem:[%s65] sm:$0x1]
    %67 = vrot.lane.b32.xlu0 %v66, 40
    %v68 = vpop.permute.xlu0 %67
    %vm69 = vcmask 392512
    %70 = vst.msk [vmem:[#allocation0] sm:$0x1] %vm69, %v68
    %s71 = scalar_lea.vmem %s0, 4
    %v72 = vld [vmem:[%s71] sm:$0x1]
    %73 = vrot.lane.b32.xlu0 %v72, 32
    %v74 = vpop.permute.xlu0 %73
    %vm75 = vcmask 326912
    %76 = vst.msk [vmem:[#allocation0] sm:$0x1] %vm75, %v74
    %s77 = scalar_lea.vmem %s0, 3
    %v78 = vld [vmem:[%s77] sm:$0x1]
    %79 = vrot.lane.b32.xlu0 %v78, 24
    %v80 = vpop.permute.xlu0 %79
    %vm81 = vcmask 261312
    %82 = vst.msk [vmem:[#allocation0] sm:$0x1] %vm81, %v80
    %s83 = scalar_lea.vmem %s0, 2
    %v84 = vld [vmem:[%s83] sm:$0x1]
    %85 = vrot.lane.b32.xlu0 %v84, 16
    %v86 = vpop.permute.xlu0 %85
    %vm87 = vcmask 195712
    %88 = vst.msk [vmem:[#allocation0] sm:$0x1] %vm87, %v86
    %s89 = scalar_lea.vmem %s0, 1
    %v90 = vld [vmem:[%s89] sm:$0x1]
    %91 = vrot.lane.b32.xlu0 %v90, 8
    %v92 = vpop.permute.xlu0 %91
    %vm93 = vcmask 130112
    %94 = vst.msk [vmem:[#allocation0] sm:$0x1] %vm93, %v92
    %s96 = sshll.u32 1, 1
    %s97 = ssub.s32 %s96, 1
    %v99 = vld [vmem:[#allocation0] sm:%s97]
    %s100 = sshll.u32 1, 1
    %s101 = ssub.s32 %s100, 1
    %102 = vst [vmem:[%s1] sm:%s101] %v99

// kernel: double_conv.4
$region0: #{double_conv.4}
  #allocation0 [shape = 'u32[]', space=smem, size = 0x4, offset = 0x4, fixed_abs, tag = 'smem constant byte address 0x4 - core index']
  #allocation1 [shape = 'u32[144,128]{1,0:T(1,128)}', space=vmem, size = 0x12000, scoped, tag = 'internal scratch']
  %s0 = inlined_call_operand.vmem [shape: bf16[2,16,128], index: 0, kind: input, shape index: {}]
  %s1 = inlined_call_operand.vmem [shape: bf16[384,128], index: 1, kind: input, shape index: {}]
  %s2 = inlined_call_operand.vmem [shape: f32[1,128], index: 2, kind: input, shape index: {}]
  %s3 = inlined_call_operand.vmem [shape: f32[1,128], index: 3, kind: input, shape index: {}]
  %s4 = inlined_call_operand.vmem [shape: bf16[2,16,128], index: 4, kind: output, shape index: {0}]
  %s5 = inlined_call_operand.vmem [shape: f32[2,1,128], index: 5, kind: output, shape index: {1}]
  %s6 = inlined_call_operand.vmem [shape: f32[2,1,128], index: 6, kind: output, shape index: {2}]
  %7 = xla_tuple %s4, %s5, %s6
  %s8 = sld [smem:[#allocation0]]
  $region65: #{double_conv.4} parent=0
    _
  %s10 = ssub.s32 1, %s8
  %s11 = scalar_select 0, %s10, %s8
  loop: start=0, step=1, limit=4
  $region2: #{double_conv.4} parent=0 // loop_pre_header
    _
  $region3: #{double_conv.4} parent=0 // loop_header
    %s13 = sphi 0, %s17
    %p14 = scmp.ge.s32.totalorder %s13, 4
    %s23 = sphi 0, %s25
    %s26 = sphi 0, %s23
    %s27 = sphi 0, %s26
    %s43 = sphi 0, %s27
    %s47 = sphi 0, %s47
    %s49 = sphi 0, %s47
    %s50 = sphi 0, %s49
    %s64 = sphi 0, %s50
    %s68 = sphi 0, %s68
    %s70 = sphi 0, %s68
    %s71 = sphi 0, %s70
    %s85 = sphi 0, %s71
    %s89 = sphi 0, %s89
    %s91 = sphi 0, %s89
    %s92 = sphi 0, %s91
    %s106 = sphi 0, %s92
    %s112 = sphi 0, %s114
    %s115 = sphi 0, %s112
    %s116 = sphi 0, %s115
    %s132 = sphi 0, %s116
    %s138 = sphi 0, %s140
    %s141 = sphi 0, %s138
    %s142 = sphi 0, %s141
    %s158 = sphi 0, %s142
    %s164 = sphi 0, %s166
    %s167 = sphi 0, %s164
    %s168 = sphi 0, %s167
    %s184 = sphi 0, %s168
  $region4: #{double_conv.4} parent=0 // loop_header_branch
    %16 = sbr.rel (%p14) target = $region8
  $region5: #{double_conv.4} parent=0 // loop_body
    %s18 = ssub.s32 %s13, 1
    %s19 = ssub.s32 %s13, 2
    %s20 = sadd.s32 %s13, 1
    %s21 = ssub.s32 %s13, %s20
    %p22 = scmp.eq.s32.totalorder %s21, 0
    %s24 = sadd.s32 %s23, 1
    %s25 = scalar_select %p22, %s23, %s24
    %p28 = pneg %p22
    %p29 = scmp.eq.s32.totalorder %s13, 1
    %p30 = por %p28, %p29
    %p31 = scmp.ne.s32.totalorder %s23, %s26
    %p32 = scmp.eq.s32.totalorder %s13, 0
    %p33 = por %p31, %p32
    %p34 = scmp.ne.s32.totalorder %s23, %s26
    %p35 = scmp.eq.s32.totalorder %s18, 1
    %p36 = por %p34, %p35
    %p37 = scmp.ne.s32.totalorder %s26, %s27
    %p38 = scmp.eq.s32.totalorder %s18, 0
    %p39 = por %p37, %p38
    %p40 = scmp.ne.s32.totalorder %s26, %s27
    %p41 = scmp.eq.s32.totalorder %s19, 1
    %p42 = por %p40, %p41
    %p44 = scmp.ne.s32.totalorder %s27, %s43
    %p45 = scmp.eq.s32.totalorder %s19, 0
    %p46 = por %p44, %p45
    %s48 = sadd.s32 %s47, 1
    %p51 = scmp.eq.s32.totalorder %s13, 1
    %p52 = scmp.ne.s32.totalorder %s47, %s49
    %p53 = scmp.eq.s32.totalorder %s13, 0
    %p54 = por %p52, %p53
    %p55 = scmp.ne.s32.totalorder %s47, %s49
    %p56 = scmp.eq.s32.totalorder %s18, 1
    %p57 = por %p55, %p56
    %p58 = scmp.ne.s32.totalorder %s49, %s50
    %p59 = scmp.eq.s32.totalorder %s18, 0
    %p60 = por %p58, %p59
    %p61 = scmp.ne.s32.totalorder %s49, %s50
    %p62 = scmp.eq.s32.totalorder %s19, 1
    %p63 = por %p61, %p62
    %p65 = scmp.ne.s32.totalorder %s50, %s64
    %p66 = scmp.eq.s32.totalorder %s19, 0
    %p67 = por %p65, %p66
    %s69 = sadd.s32 %s68, 1
    %p72 = scmp.eq.s32.totalorder %s13, 1
    %p73 = scmp.ne.s32.totalorder %s68, %s70
    %p74 = scmp.eq.s32.totalorder %s13, 0
    %p75 = por %p73, %p74
    %p76 = scmp.ne.s32.totalorder %s68, %s70
    %p77 = scmp.eq.s32.totalorder %s18, 1
    %p78 = por %p76, %p77
    %p79 = scmp.ne.s32.totalorder %s70, %s71
    %p80 = scmp.eq.s32.totalorder %s18, 0
    %p81 = por %p79, %p80
    %p82 = scmp.ne.s32.totalorder %s70, %s71
    %p83 = scmp.eq.s32.totalorder %s19, 1
    %p84 = por %p82, %p83
    %p86 = scmp.ne.s32.totalorder %s71, %s85
    %p87 = scmp.eq.s32.totalorder %s19, 0
    %p88 = por %p86, %p87
    %s90 = sadd.s32 %s89, 1
    %p93 = scmp.eq.s32.totalorder %s13, 1
    %p94 = scmp.ne.s32.totalorder %s89, %s91
    %p95 = scmp.eq.s32.totalorder %s13, 0
    %p96 = por %p94, %p95
    %p97 = scmp.ne.s32.totalorder %s89, %s91
    %p98 = scmp.eq.s32.totalorder %s18, 1
    %p99 = por %p97, %p98
    %p100 = scmp.ne.s32.totalorder %s91, %s92
    %p101 = scmp.eq.s32.totalorder %s18, 0
    %p102 = por %p100, %p101
    %p103 = scmp.ne.s32.totalorder %s91, %s92
    %p104 = scmp.eq.s32.totalorder %s19, 1
    %p105 = por %p103, %p104
    %p107 = scmp.ne.s32.totalorder %s92, %s106
    %p108 = scmp.eq.s32.totalorder %s19, 0
    %p109 = por %p107, %p108
    %s110 = ssub.s32 %s13, %s20
    %p111 = scmp.eq.s32.totalorder %s110, 0
    %s113 = sadd.s32 %s112, 1
    %s114 = scalar_select %p111, %s112, %s113
    %p117 = pneg %p111
    %p118 = scmp.eq.s32.totalorder %s13, 1
    %p119 = por %p117, %p118
    %p120 = scmp.ne.s32.totalorder %s112, %s115
    %p121 = scmp.eq.s32.totalorder %s13, 0
    %p122 = por %p120, %p121
    %p123 = scmp.ne.s32.totalorder %s112, %s115
    %p124 = scmp.eq.s32.totalorder %s18, 1
    %p125 = por %p123, %p124
    %p126 = scmp.ne.s32.totalorder %s115, %s116
    %p127 = scmp.eq.s32.totalorder %s18, 0
    %p128 = por %p126, %p127
    %p129 = scmp.ne.s32.totalorder %s115, %s116
    %p130 = scmp.eq.s32.totalorder %s19, 1
    %p131 = por %p129, %p130
    %p133 = scmp.ne.s32.totalorder %s116, %s132
    %p134 = scmp.eq.s32.totalorder %s19, 0
    %p135 = por %p133, %p134
    %s136 = ssub.s32 %s13, %s20
    %p137 = scmp.eq.s32.totalorder %s136, 0
    %s139 = sadd.s32 %s138, 1
    %s140 = scalar_select %p137, %s138, %s139
    %p143 = pneg %p137
    %p144 = scmp.eq.s32.totalorder %s13, 1
    %p145 = por %p143, %p144
    %p146 = scmp.ne.s32.totalorder %s138, %s141
    %p147 = scmp.eq.s32.totalorder %s13, 0
    %p148 = por %p146, %p147
    %p149 = scmp.ne.s32.totalorder %s138, %s141
    %p150 = scmp.eq.s32.totalorder %s18, 1
    %p151 = por %p149, %p150
    %p152 = scmp.ne.s32.totalorder %s141, %s142
    %p153 = scmp.eq.s32.totalorder %s18, 0
    %p154 = por %p152, %p153
    %p155 = scmp.ne.s32.totalorder %s141, %s142
    %p156 = scmp.eq.s32.totalorder %s19, 1
    %p157 = por %p155, %p156
    %p159 = scmp.ne.s32.totalorder %s142, %s158
    %p160 = scmp.eq.s32.totalorder %s19, 0
    %p161 = por %p159, %p160
    %s162 = ssub.s32 %s13, %s20
    %p163 = scmp.eq.s32.totalorder %s162, 0
    %s165 = sadd.s32 %s164, 1
    %s166 = scalar_select %p163, %s164, %s165
    %p169 = pneg %p163
    %p170 = scmp.eq.s32.totalorder %s13, 1
    %p171 = por %p169, %p170
    %p172 = scmp.ne.s32.totalorder %s164, %s167
    %p173 = scmp.eq.s32.totalorder %s13, 0
    %p174 = por %p172, %p173
    %p175 = scmp.ne.s32.totalorder %s164, %s167
    %p176 = scmp.eq.s32.totalorder %s18, 1
    %p177 = por %p175, %p176
    %p178 = scmp.ne.s32.totalorder %s167, %s168
    %p179 = scmp.eq.s32.totalorder %s18, 0
    %p180 = por %p178, %p179
    %p181 = scmp.ne.s32.totalorder %s167, %s168
    %p182 = scmp.eq.s32.totalorder %s19, 1
    %p183 = por %p181, %p182
    %p185 = scmp.ne.s32.totalorder %s168, %s184
    %p186 = scmp.eq.s32.totalorder %s19, 0
    %p187 = por %p185, %p186
    %p188 = scmp.le.s32.totalorder 1, %s13
    %p189 = scmp.lt.s32.totalorder %s13, 3
    %p190 = pnand %p188, %p189
    %p191 = pneg %p190
    // Predicated region
    $region9: #{double_conv.4} parent=5 // pred_check
      _
    $region10: #{double_conv.4} parent=5 // pred_check_branch
      %193 = sbr.rel (%p190) target = $region12
    $region11: #{double_conv.4} parent=5 // pred_region
      %s194 = ssub.s32 %s13, 1
      // Predicated region
      $region13: #{double_conv.4} parent=11 // pred_check
        %p195 = pneg %p60
      $region14: #{double_conv.4} parent=11 // pred_check_branch
        %197 = sbr.rel (%p195) target = $region16
      $region15: #{double_conv.4} parent=11 // pred_region
        _
      $region16: #{double_conv.4} parent=11 // pred_fallthru
        _
      // Predicated region
      $region17: #{double_conv.4} parent=11 // pred_check
        %p198 = pneg %p81
      $region18: #{double_conv.4} parent=11 // pred_check_branch
        %200 = sbr.rel (%p198) target = $region20
      $region19: #{double_conv.4} parent=11 // pred_region
        _
      $region20: #{double_conv.4} parent=11 // pred_fallthru
        _
      // Predicated region
      $region21: #{double_conv.4} parent=11 // pred_check
        %p201 = pneg %p102
      $region22: #{double_conv.4} parent=11 // pred_check_branch
        %203 = sbr.rel (%p201) target = $region24
      $region23: #{double_conv.4} parent=11 // pred_region
        _
      $region24: #{double_conv.4} parent=11 // pred_fallthru
        _
    $region12: #{double_conv.4} parent=5 // pred_fallthru
      _
    %p204 = scmp.lt.s32.totalorder %s13, 2
    // Predicated region
    $region25: #{double_conv.4} parent=5 // pred_check
      %p205 = pneg %p204
    $region26: #{double_conv.4} parent=5 // pred_check_branch
      %207 = sbr.rel (%p205) target = $region28
    $region27: #{double_conv.4} parent=5 // pred_region
      // Predicated region
      $region29: #{double_conv.4} parent=27 // pred_check
        %p208 = pneg %p33
      $region30: #{double_conv.4} parent=27 // pred_check_branch
        %210 = sbr.rel (%p208) target = $region32
      $region31: #{double_conv.4} parent=27 // pred_region
        %p211 = scmp.lt.s32.totalorder %s13, 1
        %s212 = scalar_select %p211, %s13, 1
        %s213 = smul.addr %s212, 2
        %s214 = smul.addr %s213, 4
        %s215 = scalar_lea.vmem %s0, %s214
      $region32: #{double_conv.4} parent=27 // pred_fallthru
        _
    $region28: #{double_conv.4} parent=5 // pred_fallthru
      _
    %p216 = scmp.le.s32.totalorder 1, %s13
    %p217 = scmp.lt.s32.totalorder %s13, 3
    %p218 = pnand %p216, %p217
    %p219 = pneg %p218
    // Predicated region
    $region33: #{double_conv.4} parent=5 // pred_check
      _
    $region34: #{double_conv.4} parent=5 // pred_check_branch
      %221 = sbr.rel (%p218) target = $region36
    $region35: #{double_conv.4} parent=5 // pred_region
      %s222 = ssub.s32 %s13, 1
      %p223 = scmp.lt.s32.totalorder %s18, 1
      %s224 = scalar_select %p223, %s18, 1
      %s225 = smul.addr %s224, 2
      %s226 = smul.addr %s225, 4
      %s227 = scalar_lea.vmem %s0, %s226
      %p228 = pneg %p39
      %p229 = pneg %p36
      %p230 = pneg %p60
      %p231 = pneg %p57
      %p232 = pneg %p81
      %p233 = pneg %p78
      %p234 = pneg %p102
      %p235 = pneg %p99
      %p236 = pneg %p128
      %p237 = pneg %p125
      %p238 = scmp.lt.s32.totalorder %s18, 1
      %s239 = scalar_select %p238, %s18, 1
      %s240 = smul.addr %s239, 2
      %s241 = smul.addr %s240, 4
      %s242 = scalar_lea.vmem %s4, %s241
      %p243 = pneg %p154
      %p244 = pneg %p151
      %p245 = scmp.lt.s32.totalorder %s18, 1
      %s246 = scalar_select %p245, %s18, 1
      %s247 = scalar_lea.vmem %s5, %s246
      %p248 = pneg %p180
      %p249 = pneg %p177
      %p250 = scmp.lt.s32.totalorder %s18, 1
      %s251 = scalar_select %p250, %s18, 1
      %s252 = scalar_lea.vmem %s6, %s251
      %p253 = scmp.lt.s32.totalorder %s18, 1
      %s254 = scalar_select %p253, %s18, 1
      %s255 = smul.addr %s254, 2
      %s256 = smul.addr %s255, 4
      %s257 = scalar_lea.vmem %s0, %s256
      %p258 = scmp.lt.s32.totalorder %s18, 1
      %s259 = scalar_select %p258, %s18, 1
      %s260 = smul.addr %s259, 2
      %s261 = smul.addr %s260, 4
      %s262 = scalar_lea.vmem %s4, %s261
      %p263 = scmp.lt.s32.totalorder %s18, 1
      %s264 = scalar_select %p263, %s18, 1
      %s265 = scalar_lea.vmem %s5, %s264
      %p266 = scmp.lt.s32.totalorder %s18, 1
      %s267 = scalar_select %p266, %s18, 1
      %s268 = scalar_lea.vmem %s6, %s267
      %v270 = vld [vmem:[%s257] sm:$0xf]
      %v271 = vld [vmem:[%s257 + $0x4] sm:$0xf]
      %v272 = vunpack.c.l.bf16 %v270
      %v273 = vunpack.c.l.bf16 %v271
      %v274 = vld [vmem:[%s2] sm:$0x1]
      %v276 = vlaneseq
      %v277 = vshrl.u32 %v276, 7
      %v278 = vsub.s32 0, %v277
      %v279 = vrot.slane %v274, %v278
      %v281 = vmul.f32 %v272, %v279
      %v282 = vmul.f32 %v273, %v279
      %v283 = vld [vmem:[%s3] sm:$0x1]
      %v285 = vlaneseq
      %v286 = vshrl.u32 %v285, 7
      %v287 = vsub.s32 0, %v286
      %v288 = vrot.slane %v283, %v287
      %v290 = vadd.f32 %v281, %v288
      %v291 = vadd.f32 %v282, %v288
      %v292 = vmax.f32 %v290, 0.0
      %v293 = vmax.f32 %v291, 0.0
      %v294 = vlaneseq
      %v295 = vshrl.u32 %v294, 7
      %v296 = vadd.s32 %v295, 8
      %vm297 = vcmp.ge.s32.totalorder %v295, 1
      %vm298 = vcmp.ge.s32.totalorder %v296, 1
      %v299 = vrot.slane %v292, 7
      %v300 = vrot.slane %v293, 7
      %vm301 = vcmp.lt.s32.totalorder %v295, 1
      %v302 = vsel %vm301, %v299, %v300
      %v303 = vsel %vm301, %v300, %v299
      %v304 = vsel %vm297, 1, 0
      %v305 = vsel %vm298, 1, 0
      %vm306 = vcmp.eq.s32.totalorder %v304, 1
      %vm307 = vcmp.eq.s32.totalorder %v305, 1
      %v308 = vsel %vm306, %v303, 0.0
      %v309 = vsel %vm307, %v302, 0.0
      %vm310 = vcmp.lt.s32.totalorder %v295, 15
      %vm311 = vcmp.lt.s32.totalorder %v296, 15
      %v312 = vrot.slane %v292, 1
      %v313 = vrot.slane %v293, 1
      %vm314 = vcmp.lt.s32.totalorder %v295, 7
      %v315 = vsel %vm314, %v312, %v313
      %v316 = vsel %vm314, %v313, %v312
      %v317 = vsel %vm310, 1, 0
      %v318 = vsel %vm311, 1, 0
      %vm319 = vcmp.eq.s32.totalorder %v317, 1
      %vm320 = vcmp.eq.s32.totalorder %v318, 1
      %v321 = vsel %vm319, %v315, 0.0
      %v322 = vsel %vm320, %v316, 0.0
      %v323 = vpack.c.bf16 %v309, %v308
      %v324 = vpack.c.bf16 %v293, %v292
      %v325 = vpack.c.bf16 %v322, %v321
      %v326 = vld [vmem:[%s1] sm:$0xf]
      %v327 = vld [vmem:[%s1 + $0x4] sm:$0xf]
      %v328 = vld [vmem:[%s1 + $0x8] sm:$0xf]
      %v329 = vld [vmem:[%s1 + $0xc] sm:$0xf]
      %v330 = vld [vmem:[%s1 + $0x10] sm:$0xf]
      %v331 = vld [vmem:[%s1 + $0x14] sm:$0xf]
      %v332 = vld [vmem:[%s1 + $0x18] sm:$0xf]
      %v333 = vld [vmem:[%s1 + $0x1c] sm:$0xf]
      %v334 = vld [vmem:[%s1 + $0x20] sm:$0xf]
      %v335 = vld [vmem:[%s1 + $0x24] sm:$0xf]
      %v336 = vld [vmem:[%s1 + $0x28] sm:$0xf]
      %v337 = vld [vmem:[%s1 + $0x2c] sm:$0xf]
      %v338 = vld [vmem:[%s1 + $0x30] sm:$0xf]
      %v339 = vld [vmem:[%s1 + $0x34] sm:$0xf]
      %v340 = vld [vmem:[%s1 + $0x38] sm:$0xf]
      %v341 = vld [vmem:[%s1 + $0x3c] sm:$0xf]
      %v342 = vld [vmem:[%s1 + $0x40] sm:$0xf]
      %v343 = vld [vmem:[%s1 + $0x44] sm:$0xf]
      %v344 = vld [vmem:[%s1 + $0x48] sm:$0xf]
      %v345 = vld [vmem:[%s1 + $0x4c] sm:$0xf]
      %v346 = vld [vmem:[%s1 + $0x50] sm:$0xf]
      %v347 = vld [vmem:[%s1 + $0x54] sm:$0xf]
      %v348 = vld [vmem:[%s1 + $0x58] sm:$0xf]
      %v349 = vld [vmem:[%s1 + $0x5c] sm:$0xf]
      %v350 = vld [vmem:[%s1 + $0x60] sm:$0xf]
      %v351 = vld [vmem:[%s1 + $0x64] sm:$0xf]
      %v352 = vld [vmem:[%s1 + $0x68] sm:$0xf]
      %v353 = vld [vmem:[%s1 + $0x6c] sm:$0xf]
      %v354 = vld [vmem:[%s1 + $0x70] sm:$0xf]
      %v355 = vld [vmem:[%s1 + $0x74] sm:$0xf]
      %v356 = vld [vmem:[%s1 + $0x78] sm:$0xf]
      %v357 = vld [vmem:[%s1 + $0x7c] sm:$0xf]
      %v358 = vld [vmem:[%s1 + $0x80] sm:$0xf]
      %v359 = vld [vmem:[%s1 + $0x84] sm:$0xf]
      %v360 = vld [vmem:[%s1 + $0x88] sm:$0xf]
      %v361 = vld [vmem:[%s1 + $0x8c] sm:$0xf]
      %v362 = vld [vmem:[%s1 + $0x90] sm:$0xf]
      %v363 = vld [vmem:[%s1 + $0x94] sm:$0xf]
      %v364 = vld [vmem:[%s1 + $0x98] sm:$0xf]
      %v365 = vld [vmem:[%s1 + $0x9c] sm:$0xf]
      %v366 = vld [vmem:[%s1 + $0xa0] sm:$0xf]
      %v367 = vld [vmem:[%s1 + $0xa4] sm:$0xf]
      %v368 = vld [vmem:[%s1 + $0xa8] sm:$0xf]
      %v369 = vld [vmem:[%s1 + $0xac] sm:$0xf]
      %v370 = vld [vmem:[%s1 + $0xb0] sm:$0xf]
      %v371 = vld [vmem:[%s1 + $0xb4] sm:$0xf]
      %v372 = vld [vmem:[%s1 + $0xb8] sm:$0xf]
      %v373 = vld [vmem:[%s1 + $0xbc] sm:$0xf]
      %v422 = vunpack.c.l.b16 %v326
      %v423 = vunpack.c.l.b16 %v327
      %v424 = vunpack.c.l.b16 %v328
      %v425 = vunpack.c.l.b16 %v329
      %v426 = vunpack.c.l.b16 %v330
      %v427 = vunpack.c.l.b16 %v331
      %v428 = vunpack.c.l.b16 %v332
      %v429 = vunpack.c.l.b16 %v333
      %v430 = vunpack.c.l.b16 %v334
      %v431 = vunpack.c.l.b16 %v335
      %v432 = vunpack.c.l.b16 %v336
      %v433 = vunpack.c.l.b16 %v337
      %v434 = vunpack.c.l.b16 %v338
      %v435 = vunpack.c.l.b16 %v339
      %v436 = vunpack.c.l.b16 %v340
      %v437 = vunpack.c.l.b16 %v341
      %v438 = vunpack.c.l.b16 %v342
      %v439 = vunpack.c.l.b16 %v343
      %v440 = vunpack.c.l.b16 %v344
      %v441 = vunpack.c.l.b16 %v345
      %v442 = vunpack.c.l.b16 %v346
      %v443 = vunpack.c.l.b16 %v347
      %v444 = vunpack.c.l.b16 %v348
      %v445 = vunpack.c.l.b16 %v349
      %v446 = vunpack.c.l.b16 %v350
      %v447 = vunpack.c.l.b16 %v351
      %v448 = vunpack.c.l.b16 %v352
      %v449 = vunpack.c.l.b16 %v353
      %v450 = vunpack.c.l.b16 %v354
      %v451 = vunpack.c.l.b16 %v355
      %v452 = vunpack.c.l.b16 %v356
      %v453 = vunpack.c.l.b16 %v357
      %v454 = vunpack.c.l.b16 %v358
      %v455 = vunpack.c.l.b16 %v359
      %v456 = vunpack.c.l.b16 %v360
      %v457 = vunpack.c.l.b16 %v361
      %v458 = vunpack.c.l.b16 %v362
      %v459 = vunpack.c.l.b16 %v363
      %v460 = vunpack.c.l.b16 %v364
      %v461 = vunpack.c.l.b16 %v365
      %v462 = vunpack.c.l.b16 %v366
      %v463 = vunpack.c.l.b16 %v367
      %v464 = vunpack.c.l.b16 %v368
      %v465 = vunpack.c.l.b16 %v369
      %v466 = vunpack.c.l.b16 %v370
      %v467 = vunpack.c.l.b16 %v371
      %v468 = vunpack.c.l.b16 %v372
      %v469 = vunpack.c.l.b16 %v373
      %v470 = vpack.c.b16 %v423, %v422
      %v471 = vpack.c.b16 %v425, %v424
      %v472 = vpack.c.b16 %v427, %v426
      %v473 = vpack.c.b16 %v429, %v428
      %v474 = vpack.c.b16 %v431, %v430
      %v475 = vpack.c.b16 %v433, %v432
      %v476 = vpack.c.b16 %v435, %v434
      %v477 = vpack.c.b16 %v437, %v436
      %v478 = vpack.c.b16 %v439, %v438
      %v479 = vpack.c.b16 %v441, %v440
      %v480 = vpack.c.b16 %v443, %v442
      %v481 = vpack.c.b16 %v445, %v444
      %v482 = vpack.c.b16 %v447, %v446
      %v483 = vpack.c.b16 %v449, %v448
      %v484 = vpack.c.b16 %v451, %v450
      %v485 = vpack.c.b16 %v453, %v452
      %v486 = vpack.c.b16 %v455, %v454
      %v487 = vpack.c.b16 %v457, %v456
      %v488 = vpack.c.b16 %v459, %v458
      %v489 = vpack.c.b16 %v461, %v460
      %v490 = vpack.c.b16 %v463, %v462
      %v491 = vpack.c.b16 %v465, %v464
      %v492 = vpack.c.b16 %v467, %v466
      %v493 = vpack.c.b16 %v469, %v468
      %518 = vmatprep.subr.bf16.mxu0 0
      %519 = vmatpush1.bf16.msra.mxu0 %v477
      %520 = vmatprep.subr.bf16.mxu0 0
      %521 = vmatpush1.bf16.msra.mxu0 %v476
      %522 = vmatprep.subr.bf16.mxu0 0
      %523 = vmatpush1.bf16.msra.mxu0 %v475
      %524 = vmatprep.subr.bf16.mxu0 0
      %525 = vmatpush1.bf16.msra.mxu0 %v474
      %526 = vmatprep.subr.bf16.mxu0 0
      %527 = vmatpush1.bf16.msra.mxu0 %v473
      %528 = vmatprep.subr.bf16.mxu0 0
      %529 = vmatpush1.bf16.msra.mxu0 %v472
      %530 = vmatprep.subr.bf16.mxu0 0
      %531 = vmatpush1.bf16.msra.mxu0 %v471
      %532 = vmatprep.subr.bf16.mxu0 0
      %533 = vmatpush1.bf16.msra.mxu0 %v470
      %534 = vmatprep.subr.bf16.mxu0 0
      %535 = vmatpush2.bf16.msra.mxu0 %v485
      %536 = vmatprep.subr.bf16.mxu0 0
      %537 = vmatpush2.bf16.msra.mxu0 %v484
      %538 = vmatprep.subr.bf16.mxu0 0
      %539 = vmatpush2.bf16.msra.mxu0 %v483
      %540 = vmatprep.subr.bf16.mxu0 0
      %541 = vmatpush2.bf16.msra.mxu0 %v482
      %542 = vmatprep.subr.bf16.mxu0 0
      %543 = vmatpush2.bf16.msra.mxu0 %v481
      %544 = vmatprep.subr.bf16.mxu0 0
      %545 = vmatpush2.bf16.msra.mxu0 %v480
      %546 = vmatprep.subr.bf16.mxu0 0
      %547 = vmatpush2.bf16.msra.mxu0 %v479
      %548 = vmatprep.subr.bf16.mxu0 0
      %549 = vmatpush2.bf16.msra.mxu0 %v478
      %550 = vmatprep.mubr.bf16.mxu0 %v324
      %551 = vmatmul.mubr.bf16.gmra.mxu0 %v323
      %v552 = vpop.f32.mrf.mxu0
      %v553 = vadd.f32 0.0, %v552
      %v554 = vpop.f32.mrf.mxu0
      %v555 = vpop.f32.mrf.mxu0
      %v556 = vadd.f32 0.0, %v555
      %v557 = vpop.f32.mrf.mxu0
      %558 = vdwg.mxu0
      %559 = vmatprep.subr.bf16.mxu0 0
      %560 = vmatpush1.bf16.msra.mxu0 %v493
      %561 = vmatprep.subr.bf16.mxu0 0
      %562 = vmatpush1.bf16.msra.mxu0 %v492
      %563 = vmatprep.subr.bf16.mxu0 0
      %564 = vmatpush1.bf16.msra.mxu0 %v491
      %565 = vmatprep.subr.bf16.mxu0 0
      %566 = vmatpush1.bf16.msra.mxu0 %v490
      %567 = vmatprep.subr.bf16.mxu0 0
      %568 = vmatpush1.bf16.msra.mxu0 %v489
      %569 = vmatprep.subr.bf16.mxu0 0
      %570 = vmatpush1.bf16.msra.mxu0 %v488
      %571 = vmatprep.subr.bf16.mxu0 0
      %572 = vmatpush1.bf16.msra.mxu0 %v487
      %573 = vmatprep.subr.bf16.mxu0 0
      %574 = vmatpush1.bf16.msra.mxu0 %v486
      %575 = vmatprep.subr.bf16.mxu0 0
      %576 = vmatpush2.bf16.msra.mxu0 0
      %577 = vmatprep.subr.bf16.mxu0 0
      %578 = vmatpush2.bf16.msra.mxu0 0
      %579 = vmatprep.subr.bf16.mxu0 0
      %580 = vmatpush2.bf16.msra.mxu0 0
      %581 = vmatprep.subr.bf16.mxu0 0
      %582 = vmatpush2.bf16.msra.mxu0 0
      %583 = vmatprep.subr.bf16.mxu0 0
      %584 = vmatpush2.bf16.msra.mxu0 0
      %585 = vmatprep.subr.bf16.mxu0 0
      %586 = vmatpush2.bf16.msra.mxu0 0
      %587 = vmatprep.subr.bf16.mxu0 0
      %588 = vmatpush2.bf16.msra.mxu0 0
      %589 = vmatprep.subr.bf16.mxu0 0
      %590 = vmatpush2.bf16.msra.mxu0 0
      %591 = vmatprep.mubr.bf16.mxu0 0
      %592 = vmatmul.mubr.bf16.gmra.mxu0 %v325
      %v593 = vpop.f32.mrf.mxu0
      %v594 = vadd.f32 %v553, %v593
      %v595 = vpop.f32.mrf.mxu0
      %v596 = vpop.f32.mrf.mxu0
      %v597 = vadd.f32 %v556, %v596
      %v598 = vpop.f32.mrf.mxu0
      %599 = vdwg.mxu0
      %v600 = vadd.f32 %v594, %v597
      %v601 = vrot.slane %v600, 4
      %v602 = vadd.f32 %v600, %v601
      %v603 = vrot.slane %v602, 2
      %v604 = vadd.f32 %v602, %v603
      %v605 = vrot.slane %v604, 1
      %v606 = vadd.f32 %v604, %v605
      %607 = vst [vmem:[%s265] sm:$0x1] %v606
      %v608 = vmul.f32 %v594, %v594
      %v609 = vmul.f32 %v597, %v597
      %v610 = vadd.f32 %v608, %v609
      %v611 = vrot.slane %v610, 4
      %v612 = vadd.f32 %v610, %v611
      %v613 = vrot.slane %v612, 2
      %v614 = vadd.f32 %v612, %v613
      %v615 = vrot.slane %v614, 1
      %v616 = vadd.f32 %v614, %v615
      %617 = vst [vmem:[%s268] sm:$0x1] %v616
      %v618 = vpack.c.bf16 %v597, %v594
      %v620 = vunpack.c.l.b16 %v618
      %v621 = vunpack.c.h.b16 %v618
      %v622 = vpack.c.b16 %v620, %v620
      %v623 = vpack.c.b16 %v621, %v621
      %626 = vst [vmem:[%s262] sm:$0xf] %v622
      %627 = vst [vmem:[%s262 + $0x4] sm:$0xf] %v623
      %p628 = scmp.lt.s32.totalorder %s18, 1
      %s629 = scalar_select %p628, %s18, 1
      %s630 = smul.addr %s629, 2
      %s631 = smul.addr %s630, 4
      %s632 = scalar_lea.vmem %s4, %s631
      %p633 = scmp.lt.s32.totalorder %s18, 1
      %s634 = scalar_select %p633, %s18, 1
      %s635 = scalar_lea.vmem %s5, %s634
      %p636 = scmp.lt.s32.totalorder %s18, 1
      %s637 = scalar_select %p636, %s18, 1
      %s638 = scalar_lea.vmem %s6, %s637
      // Predicated region
      $region37: #{double_conv.4} parent=35 // pred_check
        %p639 = pneg %p125
      $region38: #{double_conv.4} parent=35 // pred_check_branch
        %641 = sbr.rel (%p639) target = $region40
      $region39: #{double_conv.4} parent=35 // pred_region
        _
      $region40: #{double_conv.4} parent=35 // pred_fallthru
        _
      // Predicated region
      $region41: #{double_conv.4} parent=35 // pred_check
        %p642 = pneg %p151
      $region42: #{double_conv.4} parent=35 // pred_check_branch
        %644 = sbr.rel (%p642) target = $region44
      $region43: #{double_conv.4} parent=35 // pred_region
        _
      $region44: #{double_conv.4} parent=35 // pred_fallthru
        _
      // Predicated region
      $region45: #{double_conv.4} parent=35 // pred_check
        %p645 = pneg %p177
      $region46: #{double_conv.4} parent=35 // pred_check_branch
        %647 = sbr.rel (%p645) target = $region48
      $region47: #{double_conv.4} parent=35 // pred_region
        _
      $region48: #{double_conv.4} parent=35 // pred_fallthru
        _
    $region36: #{double_conv.4} parent=5 // pred_fallthru
      _
    %p648 = scmp.le.s32.totalorder 2, %s13
    // Predicated region
    $region49: #{double_conv.4} parent=5 // pred_check
      %p649 = pneg %p648
    $region50: #{double_conv.4} parent=5 // pred_check_branch
      %651 = sbr.rel (%p649) target = $region52
    $region51: #{double_conv.4} parent=5 // pred_region
      %s652 = ssub.s32 %s13, 2
      // Predicated region
      $region53: #{double_conv.4} parent=51 // pred_check
        %p653 = pneg %p131
      $region54: #{double_conv.4} parent=51 // pred_check_branch
        %655 = sbr.rel (%p653) target = $region56
      $region55: #{double_conv.4} parent=51 // pred_region
        %p656 = scmp.lt.s32.totalorder %s19, 1
        %s657 = scalar_select %p656, %s19, 1
        %s658 = smul.addr %s657, 2
        %s659 = smul.addr %s658, 4
        %s660 = scalar_lea.vmem %s4, %s659
      $region56: #{double_conv.4} parent=51 // pred_fallthru
        _
      // Predicated region
      $region57: #{double_conv.4} parent=51 // pred_check
        %p661 = pneg %p157
      $region58: #{double_conv.4} parent=51 // pred_check_branch
        %663 = sbr.rel (%p661) target = $region60
      $region59: #{double_conv.4} parent=51 // pred_region
        %p664 = scmp.lt.s32.totalorder %s19, 1
        %s665 = scalar_select %p664, %s19, 1
        %s666 = scalar_lea.vmem %s5, %s665
      $region60: #{double_conv.4} parent=51 // pred_fallthru
        _
      // Predicated region
      $region61: #{double_conv.4} parent=51 // pred_check
        %p667 = pneg %p183
      $region62: #{double_conv.4} parent=51 // pred_check_branch
        %669 = sbr.rel (%p667) target = $region64
      $region63: #{double_conv.4} parent=51 // pred_region
        %p670 = scmp.lt.s32.totalorder %s19, 1
        %s671 = scalar_select %p670, %s19, 1
        %s672 = scalar_lea.vmem %s6, %s671
      $region64: #{double_conv.4} parent=51 // pred_fallthru
        _
    $region52: #{double_conv.4} parent=5 // pred_fallthru
      _
  $region6: #{double_conv.4} parent=0 // loop_footer
    %s17 = sadd.s32 1, %s13
  $region7: #{double_conv.4} parent=0 // loop_footer_branch
    %12 = sbr.rel target = $region3
  $region8: #{double_conv.4} parent=0 // loop_exit
    _

// kernel: double_conv.5
$region0: #{double_conv.5}
  #allocation0 [shape = 'u32[]', space=smem, size = 0x4, offset = 0x4, fixed_abs, tag = 'smem constant byte address 0x4 - core index']
  #allocation1 [shape = 'u32[144,128]{1,0:T(1,128)}', space=vmem, size = 0x12000, scoped, tag = 'internal scratch']
  %s0 = inlined_call_operand.vmem [shape: bf16[2,16,128], index: 0, kind: input, shape index: {}]
  %s1 = inlined_call_operand.vmem [shape: f32[1,128], index: 1, kind: input, shape index: {}]
  %s2 = inlined_call_operand.vmem [shape: f32[1,128], index: 2, kind: input, shape index: {}]
  %s3 = inlined_call_operand.vmem [shape: f32[2,16,128], index: 3, kind: output, shape index: {}]
  %s4 = sld [smem:[#allocation0]]
  $region45: #{double_conv.5} parent=0
    _
  %s6 = ssub.s32 1, %s4
  %s7 = scalar_select 0, %s6, %s4
  loop: start=0, step=1, limit=4
  $region2: #{double_conv.5} parent=0 // loop_pre_header
    _
  $region3: #{double_conv.5} parent=0 // loop_header
    %s9 = sphi 0, %s13
    %p10 = scmp.ge.s32.totalorder %s9, 4
    %s19 = sphi 0, %s21
    %s22 = sphi 0, %s19
    %s23 = sphi 0, %s22
    %s39 = sphi 0, %s23
    %s43 = sphi 0, %s43
    %s45 = sphi 0, %s43
    %s46 = sphi 0, %s45
    %s60 = sphi 0, %s46
    %s64 = sphi 0, %s64
    %s66 = sphi 0, %s64
    %s67 = sphi 0, %s66
    %s81 = sphi 0, %s67
    %s87 = sphi 0, %s89
    %s90 = sphi 0, %s87
    %s91 = sphi 0, %s90
    %s107 = sphi 0, %s91
  $region4: #{double_conv.5} parent=0 // loop_header_branch
    %12 = sbr.rel (%p10) target = $region8
  $region5: #{double_conv.5} parent=0 // loop_body
    %s14 = ssub.s32 %s9, 1
    %s15 = ssub.s32 %s9, 2
    %s16 = sadd.s32 %s9, 1
    %s17 = ssub.s32 %s9, %s16
    %p18 = scmp.eq.s32.totalorder %s17, 0
    %s20 = sadd.s32 %s19, 1
    %s21 = scalar_select %p18, %s19, %s20
    %p24 = pneg %p18
    %p25 = scmp.eq.s32.totalorder %s9, 1
    %p26 = por %p24, %p25
    %p27 = scmp.ne.s32.totalorder %s19, %s22
    %p28 = scmp.eq.s32.totalorder %s9, 0
    %p29 = por %p27, %p28
    %p30 = scmp.ne.s32.totalorder %s19, %s22
    %p31 = scmp.eq.s32.totalorder %s14, 1
    %p32 = por %p30, %p31
    %p33 = scmp.ne.s32.totalorder %s22, %s23
    %p34 = scmp.eq.s32.totalorder %s14, 0
    %p35 = por %p33, %p34
    %p36 = scmp.ne.s32.totalorder %s22, %s23
    %p37 = scmp.eq.s32.totalorder %s15, 1
    %p38 = por %p36, %p37
    %p40 = scmp.ne.s32.totalorder %s23, %s39
    %p41 = scmp.eq.s32.totalorder %s15, 0
    %p42 = por %p40, %p41
    %s44 = sadd.s32 %s43, 1
    %p47 = scmp.eq.s32.totalorder %s9, 1
    %p48 = scmp.ne.s32.totalorder %s43, %s45
    %p49 = scmp.eq.s32.totalorder %s9, 0
    %p50 = por %p48, %p49
    %p51 = scmp.ne.s32.totalorder %s43, %s45
    %p52 = scmp.eq.s32.totalorder %s14, 1
    %p53 = por %p51, %p52
    %p54 = scmp.ne.s32.totalorder %s45, %s46
    %p55 = scmp.eq.s32.totalorder %s14, 0
    %p56 = por %p54, %p55
    %p57 = scmp.ne.s32.totalorder %s45, %s46
    %p58 = scmp.eq.s32.totalorder %s15, 1
    %p59 = por %p57, %p58
    %p61 = scmp.ne.s32.totalorder %s46, %s60
    %p62 = scmp.eq.s32.totalorder %s15, 0
    %p63 = por %p61, %p62
    %s65 = sadd.s32 %s64, 1
    %p68 = scmp.eq.s32.totalorder %s9, 1
    %p69 = scmp.ne.s32.totalorder %s64, %s66
    %p70 = scmp.eq.s32.totalorder %s9, 0
    %p71 = por %p69, %p70
    %p72 = scmp.ne.s32.totalorder %s64, %s66
    %p73 = scmp.eq.s32.totalorder %s14, 1
    %p74 = por %p72, %p73
    %p75 = scmp.ne.s32.totalorder %s66, %s67
    %p76 = scmp.eq.s32.totalorder %s14, 0
    %p77 = por %p75, %p76
    %p78 = scmp.ne.s32.totalorder %s66, %s67
    %p79 = scmp.eq.s32.totalorder %s15, 1
    %p80 = por %p78, %p79
    %p82 = scmp.ne.s32.totalorder %s67, %s81
    %p83 = scmp.eq.s32.totalorder %s15, 0
    %p84 = por %p82, %p83
    %s85 = ssub.s32 %s9, %s16
    %p86 = scmp.eq.s32.totalorder %s85, 0
    %s88 = sadd.s32 %s87, 1
    %s89 = scalar_select %p86, %s87, %s88
    %p92 = pneg %p86
    %p93 = scmp.eq.s32.totalorder %s9, 1
    %p94 = por %p92, %p93
    %p95 = scmp.ne.s32.totalorder %s87, %s90
    %p96 = scmp.eq.s32.totalorder %s9, 0
    %p97 = por %p95, %p96
    %p98 = scmp.ne.s32.totalorder %s87, %s90
    %p99 = scmp.eq.s32.totalorder %s14, 1
    %p100 = por %p98, %p99
    %p101 = scmp.ne.s32.totalorder %s90, %s91
    %p102 = scmp.eq.s32.totalorder %s14, 0
    %p103 = por %p101, %p102
    %p104 = scmp.ne.s32.totalorder %s90, %s91
    %p105 = scmp.eq.s32.totalorder %s15, 1
    %p106 = por %p104, %p105
    %p108 = scmp.ne.s32.totalorder %s91, %s107
    %p109 = scmp.eq.s32.totalorder %s15, 0
    %p110 = por %p108, %p109
    %p111 = scmp.le.s32.totalorder 1, %s9
    %p112 = scmp.lt.s32.totalorder %s9, 3
    %p113 = pnand %p111, %p112
    %p114 = pneg %p113
    // Predicated region
    $region9: #{double_conv.5} parent=5 // pred_check
      _
    $region10: #{double_conv.5} parent=5 // pred_check_branch
      %116 = sbr.rel (%p113) target = $region12
    $region11: #{double_conv.5} parent=5 // pred_region
      %s117 = ssub.s32 %s9, 1
      // Predicated region
      $region13: #{double_conv.5} parent=11 // pred_check
        %p118 = pneg %p56
      $region14: #{double_conv.5} parent=11 // pred_check_branch
        %120 = sbr.rel (%p118) target = $region16
      $region15: #{double_conv.5} parent=11 // pred_region
        _
      $region16: #{double_conv.5} parent=11 // pred_fallthru
        _
      // Predicated region
      $region17: #{double_conv.5} parent=11 // pred_check
        %p121 = pneg %p77
      $region18: #{double_conv.5} parent=11 // pred_check_branch
        %123 = sbr.rel (%p121) target = $region20
      $region19: #{double_conv.5} parent=11 // pred_region
        _
      $region20: #{double_conv.5} parent=11 // pred_fallthru
        _
    $region12: #{double_conv.5} parent=5 // pred_fallthru
      _
    %p124 = scmp.lt.s32.totalorder %s9, 2
    // Predicated region
    $region21: #{double_conv.5} parent=5 // pred_check
      %p125 = pneg %p124
    $region22: #{double_conv.5} parent=5 // pred_check_branch
      %127 = sbr.rel (%p125) target = $region24
    $region23: #{double_conv.5} parent=5 // pred_region
      // Predicated region
      $region25: #{double_conv.5} parent=23 // pred_check
        %p128 = pneg %p29
      $region26: #{double_conv.5} parent=23 // pred_check_branch
        %130 = sbr.rel (%p128) target = $region28
      $region27: #{double_conv.5} parent=23 // pred_region
        %p131 = scmp.lt.s32.totalorder %s9, 1
        %s132 = scalar_select %p131, %s9, 1
        %s133 = smul.addr %s132, 2
        %s134 = smul.addr %s133, 4
        %s135 = scalar_lea.vmem %s0, %s134
      $region28: #{double_conv.5} parent=23 // pred_fallthru
        _
    $region24: #{double_conv.5} parent=5 // pred_fallthru
      _
    %p136 = scmp.le.s32.totalorder 1, %s9
    %p137 = scmp.lt.s32.totalorder %s9, 3
    %p138 = pnand %p136, %p137
    %p139 = pneg %p138
    // Predicated region
    $region29: #{double_conv.5} parent=5 // pred_check
      _
    $region30: #{double_conv.5} parent=5 // pred_check_branch
      %141 = sbr.rel (%p138) target = $region32
    $region31: #{double_conv.5} parent=5 // pred_region
      %s142 = ssub.s32 %s9, 1
      %p143 = scmp.lt.s32.totalorder %s14, 1
      %s144 = scalar_select %p143, %s14, 1
      %s145 = smul.addr %s144, 2
      %s146 = smul.addr %s145, 4
      %s147 = scalar_lea.vmem %s0, %s146
      %p148 = pneg %p35
      %p149 = pneg %p32
      %p150 = pneg %p56
      %p151 = pneg %p53
      %p152 = pneg %p77
      %p153 = pneg %p74
      %p154 = pneg %p103
      %p155 = pneg %p100
      %p156 = scmp.lt.s32.totalorder %s14, 1
      %s157 = scalar_select %p156, %s14, 1
      %s158 = smul.addr %s157, 2
      %s159 = smul.addr %s158, 8
      %s160 = scalar_lea.vmem %s3, %s159
      %p161 = scmp.lt.s32.totalorder %s14, 1
      %s162 = scalar_select %p161, %s14, 1
      %s163 = smul.addr %s162, 2
      %s164 = smul.addr %s163, 4
      %s165 = scalar_lea.vmem %s0, %s164
      %p166 = scmp.lt.s32.totalorder %s14, 1
      %s167 = scalar_select %p166, %s14, 1
      %s168 = smul.addr %s167, 2
      %s169 = smul.addr %s168, 8
      %s170 = scalar_lea.vmem %s3, %s169
      %v171 = vld [vmem:[%s165] sm:$0xf]
      %v172 = vld [vmem:[%s165 + $0x4] sm:$0xf]
      %v173 = vunpack.c.l.bf16 %v171
      %v174 = vunpack.c.l.bf16 %v172
      %v175 = vld [vmem:[%s1] sm:$0x1]
      %v177 = vlaneseq
      %v178 = vshrl.u32 %v177, 7
      %v179 = vsub.s32 0, %v178
      %v180 = vrot.slane %v175, %v179
      %v182 = vmul.f32 %v173, %v180
      %v183 = vmul.f32 %v174, %v180
      %v184 = vld [vmem:[%s2] sm:$0x1]
      %v186 = vlaneseq
      %v187 = vshrl.u32 %v186, 7
      %v188 = vsub.s32 0, %v187
      %v189 = vrot.slane %v184, %v188
      %v191 = vadd.f32 %v182, %v189
      %v192 = vadd.f32 %v183, %v189
      %v193 = vmax.f32 %v191, 0.0
      %v194 = vmax.f32 %v192, 0.0
      %195 = vst [vmem:[%s170] sm:$0xff] %v193
      %196 = vst [vmem:[%s170 + $0x8] sm:$0xff] %v194
      %p197 = scmp.lt.s32.totalorder %s14, 1
      %s198 = scalar_select %p197, %s14, 1
      %s199 = smul.addr %s198, 2
      %s200 = smul.addr %s199, 8
      %s201 = scalar_lea.vmem %s3, %s200
      // Predicated region
      $region33: #{double_conv.5} parent=31 // pred_check
        %p202 = pneg %p100
      $region34: #{double_conv.5} parent=31 // pred_check_branch
        %204 = sbr.rel (%p202) target = $region36
      $region35: #{double_conv.5} parent=31 // pred_region
        _
      $region36: #{double_conv.5} parent=31 // pred_fallthru
        _
    $region32: #{double_conv.5} parent=5 // pred_fallthru
      _
    %p205 = scmp.le.s32.totalorder 2, %s9
    // Predicated region
    $region37: #{double_conv.5} parent=5 // pred_check
      %p206 = pneg %p205
    $region38: #{double_conv.5} parent=5 // pred_check_branch
      %208 = sbr.rel (%p206) target = $region40
    $region39: #{double_conv.5} parent=5 // pred_region
      %s209 = ssub.s32 %s9, 2
      // Predicated region
      $region41: #{double_conv.5} parent=39 // pred_check
        %p210 = pneg %p106
      $region42: #{double_conv.5} parent=39 // pred_check_branch
        %212 = sbr.rel (%p210) target = $region44
      $region43: #{double_conv.5} parent=39 // pred_region
        %p213 = scmp.lt.s32.totalorder %s15, 1
        %s214 = scalar_select %p213, %s15, 1
        %s215 = smul.addr %s214, 2
        %s216 = smul.addr %s215, 8
        %s217 = scalar_lea.vmem %s3, %s216
      $region44: #{double_conv.5} parent=39 // pred_fallthru
        _
    $region40: #{double_conv.5} parent=5 // pred_fallthru
      _
  $region6: #{double_conv.5} parent=0 // loop_footer
    %s13 = sadd.s32 1, %s9
  $region7: #{double_conv.5} parent=0 // loop_footer_branch
    %8 = sbr.rel target = $region3
  $region8: #{double_conv.5} parent=0 // loop_exit
    _

</llo_original>
